<compile_context>
chip_gen: v7x
topology: tpu7x:2x2x1
jax: 0.10.0
libtpu: 0.0.40
codegen_flags: <defaults>
</compile_context>

<pallas_src>
import math

import jax
import jax.numpy as jnp
from jax.experimental import pallas as pl
from jax.experimental.pallas import tpu as pltpu

# ---- config (consistent with the BertConfig fields used by the module) ----
B = 2           # batch
S = 8           # sequence length
H = 32          # hidden_size
NH = 4          # num_attention_heads
DH = H // NH    # attention_head_size
I = 64          # intermediate_size
LN_EPS = 1e-12  # layer_norm_eps
# hidden_act = 'gelu' (exact erf gelu, like the torch reference)


def _erf(x):
    # Abramowitz & Stegun 7.1.26 rational approximation (max abs err ~1.5e-7),
    # purely elementwise so it lowers cleanly on the VPU/EUP.
    a1, a2, a3, a4, a5 = 0.254829592, -0.284496736, 1.421413741, -1.453152027, 1.061405429
    p = 0.3275911
    ax = jnp.abs(x)
    t = 1.0 / (1.0 + p * ax)
    poly = ((((a5 * t + a4) * t + a3) * t + a2) * t + a1) * t
    y = 1.0 - poly * jnp.exp(-ax * ax)
    return jnp.where(x >= 0.0, y, -y)


def _gelu(x):
    return x * 0.5 * (1.0 + _erf(x / math.sqrt(2.0)))


def _layer_norm(x, w, b):
    u = jnp.mean(x, axis=-1, keepdims=True)
    d = x - u
    s = jnp.mean(d * d, axis=-1, keepdims=True)
    return w * (d * jax.lax.rsqrt(s + LN_EPS)) + b


def bert_layer_kernel(x_ref, mask_ref, wqkv_ref, bqkv_ref, wo_ref, bo_ref,
                      ln1w_ref, ln1b_ref, wi_ref, bi_ref, wo2_ref, bo2_ref,
                      ln2w_ref, ln2b_ref, out_ref, ctx_ref):
    x = x_ref[...]             # (B*S, H) -- all batches' rows, flattened
    mask = mask_ref[...]       # (B, S)  additive key mask

    # --- BertSelfAttention: fused Q|K|V projection: one (16,32)x(32,96) matmul ---
    qkv = jnp.dot(x, wqkv_ref[...], preferred_element_type=jnp.float32) + bqkv_ref[...]
    q = qkv[:, 0 * H:1 * H]
    k = qkv[:, 1 * H:2 * H]
    v = qkv[:, 2 * H:3 * H]

    scale = 1.0 / math.sqrt(DH)
    for b in range(B):                              # static, unrolled
        rows = slice(b * S, (b + 1) * S)
        qb, kb, vb = q[rows, :], k[rows, :], v[rows, :]
        # Hoist the mask broadcast out of the head loop (once per batch element).
        mask_b = jnp.broadcast_to(mask[b:b + 1, :], (S, S))
        for h in range(NH):                         # static, unrolled
            cols = slice(h * DH, (h + 1) * DH)
            qh, kh, vh = qb[:, cols], kb[:, cols], vb[:, cols]
            scores = jnp.dot(qh, kh.T, preferred_element_type=jnp.float32) * scale + mask_b
            scores = scores - jnp.max(scores, axis=-1, keepdims=True)
            p = jnp.exp(scores)
            p = p * pl.reciprocal(jnp.sum(p, axis=-1, keepdims=True), approx=True)
            # attention_probs dropout is identity in eval mode; head_mask is None.
            # Write this head's context straight into VMEM scratch (no concat).
            ctx_ref[rows, cols] = jnp.dot(p, vh, preferred_element_type=jnp.float32)

    ctx = ctx_ref[...]                              # (B*S, H)

    # --- BertSelfOutput: dense + residual + LayerNorm ---
    attn = jnp.dot(ctx, wo_ref[...], preferred_element_type=jnp.float32) + bo_ref[...]
    h1 = _layer_norm(attn + x, ln1w_ref[...], ln1b_ref[...])

    # --- BertIntermediate: dense + gelu ---
    inter = _gelu(jnp.dot(h1, wi_ref[...], preferred_element_type=jnp.float32) + bi_ref[...])

    # --- BertOutput: dense + residual + LayerNorm ---
    out = jnp.dot(inter, wo2_ref[...], preferred_element_type=jnp.float32) + bo2_ref[...]
    out_ref[...] = _layer_norm(out + h1, ln2w_ref[...], ln2b_ref[...])


def bert_layer(x, attn_mask, params):
    """x: (B, S, H) f32, attn_mask: (B, 1, S) additive f32 mask."""
    (wq, bq, wk, bk, wv, bv, wo, bo, ln1w, ln1b, wi, bi, wo2, bo2, ln2w, ln2b) = params
    # Fuse Q|K|V weights/biases once in the wrapper (outside the kernel).
    wqkv = jnp.concatenate([wq, wk, wv], axis=1)    # (H, 3H)
    bqkv = jnp.concatenate([bq, bk, bv], axis=1)    # (1, 3H)

    x2d = x.reshape(B * S, H)
    mask2d = attn_mask.reshape(B, S)

    def full(shape):
        return pl.BlockSpec(shape, lambda: (0,) * len(shape))

    in_specs = [
        full((B * S, H)),                       # x (flattened)
        full((B, S)),                           # additive mask
        full((H, 3 * H)), full((1, 3 * H)),     # fused Wqkv, bqkv
        full((H, H)), full((1, H)),             # Wo, bo
        full((1, H)), full((1, H)),             # ln1 w, b
        full((H, I)), full((1, I)),             # Wi, bi
        full((I, H)), full((1, H)),             # Wo2, bo2
        full((1, H)), full((1, H)),             # ln2 w, b
    ]

    # Single invocation (no grid): total compute is tiny, so per-grid-step
    # overhead would dominate; everything fits VMEM trivially.
    # TODO(synk): output last dim is 32 (<128 lanes) so the writeback is a
    # masked store; at these sizes a lane-dense repack is not worth the relayout.
    out2d = pl.pallas_call(
        bert_layer_kernel,
        out_shape=jax.ShapeDtypeStruct((B * S, H), jnp.float32),
        in_specs=in_specs,
        out_specs=full((B * S, H)),
        scratch_shapes=[pltpu.VMEM((B * S, H), jnp.float32)],
    )(x2d, mask2d, wqkv, bqkv, wo, bo, ln1w, ln1b, wi, bi, wo2, bo2, ln2w, ln2b)
    return out2d.reshape(B, S, H)


# --------------------------- pure-JAX reference ------------------------------
def bert_layer_ref(x, attn_mask, params):
    (wq, bq, wk, bk, wv, bv, wo, bo, ln1w, ln1b, wi, bi, wo2, bo2, ln2w, ln2b) = params

    def ln(t, w, b):
        u = jnp.mean(t, axis=-1, keepdims=True)
        s = jnp.mean((t - u) ** 2, axis=-1, keepdims=True)
        return w * ((t - u) / jnp.sqrt(s + LN_EPS)) + b

    q = x @ wq + bq
    k = x @ wk + bk
    v = x @ wv + bv
    split = lambda t: t.reshape(B, S, NH, DH).transpose(0, 2, 1, 3)  # (B, NH, S, DH)
    qh, kh, vh = split(q), split(k), split(v)
    scores = jnp.einsum("bhqd,bhkd->bhqk", qh, kh) / math.sqrt(DH)
    scores = scores + attn_mask[:, :, None, :]          # (B,1,S) -> broadcast over heads/query
    probs = jax.nn.softmax(scores, axis=-1)
    ctx = jnp.einsum("bhqk,bhkd->bhqd", probs, vh).transpose(0, 2, 1, 3).reshape(B, S, H)
    attn = ln(ctx @ wo + bo + x, ln1w[0], ln1b[0])
    inter = attn @ wi + bi
    inter = inter * 0.5 * (1.0 + jax.scipy.special.erf(inter / math.sqrt(2.0)))
    return ln(inter @ wo2 + bo2 + attn, ln2w[0], ln2b[0])


if __name__ == "__main__":
    key = jax.random.PRNGKey(0)
    keys = jax.random.split(key, 12)

    def init_w(k, shape, scale=0.02):
        return (scale * jax.random.normal(k, shape)).astype(jnp.float32)

    # Parameters (stored [in, out]; biases as [1, out]); LayerNorm: weight=1, bias=0.
    wq = init_w(keys[0], (H, H)); bq = jnp.zeros((1, H), jnp.float32)
    wk = init_w(keys[1], (H, H)); bk = jnp.zeros((1, H), jnp.float32)
    wv = init_w(keys[2], (H, H)); bv = jnp.zeros((1, H), jnp.float32)
    wo = init_w(keys[3], (H, H)); bo = init_w(keys[4], (1, H))
    ln1w = jnp.ones((1, H), jnp.float32); ln1b = jnp.zeros((1, H), jnp.float32)
    wi = init_w(keys[5], (H, I)); bi = init_w(keys[6], (1, I))
    wo2 = init_w(keys[7], (I, H)); bo2 = init_w(keys[8], (1, H))
    ln2w = jnp.ones((1, H), jnp.float32); ln2b = jnp.zeros((1, H), jnp.float32)
    params = (wq, bq, wk, bk, wv, bv, wo, bo, ln1w, ln1b, wi, bi, wo2, bo2, ln2w, ln2b)

    # Inputs
    x = jax.random.normal(keys[9], (B, S, H), dtype=jnp.float32)
    # Additive attention mask: last 2 key positions of batch 1 are masked out.
    pad = jnp.zeros((B, S), jnp.float32).at[1, S - 2:].set(-10000.0)
    attn_mask = pad[:, None, :]  # (B, 1, S)

    out = bert_layer(x, attn_mask, params)
    out = jax.block_until_ready(out)

    ref = bert_layer_ref(x, attn_mask, params)
    assert out.shape == (B, S, H)
    assert jnp.allclose(out, ref, atol=1e-4, rtol=1e-4), float(jnp.max(jnp.abs(out - ref)))

    print("KERNEL_OK")
</pallas_src>

<mosaic_0001>
module attributes {stable_mosaic.version = 11 : i64} {
  func.func @bert_layer_kernel(%arg0: memref<16x32xf32, #tpu.memory_space<vmem>>, %arg1: memref<2x8xf32, #tpu.memory_space<vmem>>, %arg2: memref<32x96xf32, #tpu.memory_space<vmem>>, %arg3: memref<1x96xf32, #tpu.memory_space<vmem>>, %arg4: memref<32x32xf32, #tpu.memory_space<vmem>>, %arg5: memref<1x32xf32, #tpu.memory_space<vmem>>, %arg6: memref<1x32xf32, #tpu.memory_space<vmem>>, %arg7: memref<1x32xf32, #tpu.memory_space<vmem>>, %arg8: memref<32x64xf32, #tpu.memory_space<vmem>>, %arg9: memref<1x64xf32, #tpu.memory_space<vmem>>, %arg10: memref<64x32xf32, #tpu.memory_space<vmem>>, %arg11: memref<1x32xf32, #tpu.memory_space<vmem>>, %arg12: memref<1x32xf32, #tpu.memory_space<vmem>>, %arg13: memref<1x32xf32, #tpu.memory_space<vmem>>, %arg14: memref<16x32xf32, #tpu.memory_space<vmem>>, %arg15: memref<16x32xf32, #tpu.memory_space<vmem>>) attributes {dimension_semantics = [], scalar_prefetch = 0 : i64, scratch_operands = 1 : i64, tpu.core_type = #tpu.core_type<tc>} {
    %c0 = arith.constant 0 : index
    %c0_0 = arith.constant 0 : index
    %0 = vector.load %arg0[%c0, %c0_0] : memref<16x32xf32, #tpu.memory_space<vmem>>, vector<16x32xf32>
    %c0_1 = arith.constant 0 : index
    %c0_2 = arith.constant 0 : index
    %1 = vector.load %arg1[%c0_1, %c0_2] : memref<2x8xf32, #tpu.memory_space<vmem>>, vector<2x8xf32>
    %c0_3 = arith.constant 0 : index
    %c0_4 = arith.constant 0 : index
    %2 = vector.load %arg2[%c0_3, %c0_4] : memref<32x96xf32, #tpu.memory_space<vmem>>, vector<32x96xf32>
    %cst = arith.constant dense<0.000000e+00> : vector<16x96xf32>
    %3 = tpu.matmul %0, %2, %cst {dimension_numbers = #tpu.dot_dimension_numbers<[1], [0], [0], [1], [0, 0, 1, 1], [], []>} : vector<16x32xf32>, vector<32x96xf32>, vector<16x96xf32> -> vector<16x96xf32>
    %c0_5 = arith.constant 0 : index
    %c0_6 = arith.constant 0 : index
    %4 = vector.load %arg3[%c0_5, %c0_6] : memref<1x96xf32, #tpu.memory_space<vmem>>, vector<1x96xf32>
    %5 = vector.broadcast %4 : vector<1x96xf32> to vector<16x96xf32>
    %6 = arith.addf %3, %5 : vector<16x96xf32>
    %7 = vector.extract_strided_slice %6 {offsets = [0, 0], sizes = [16, 32], strides = [1, 1]} : vector<16x96xf32> to vector<16x32xf32>
    %8 = vector.extract_strided_slice %6 {offsets = [0, 32], sizes = [16, 32], strides = [1, 1]} : vector<16x96xf32> to vector<16x32xf32>
    %9 = vector.extract_strided_slice %6 {offsets = [0, 64], sizes = [16, 32], strides = [1, 1]} : vector<16x96xf32> to vector<16x32xf32>
    %10 = vector.extract_strided_slice %7 {offsets = [0, 0], sizes = [8, 32], strides = [1, 1]} : vector<16x32xf32> to vector<8x32xf32>
    %11 = vector.extract_strided_slice %8 {offsets = [0, 0], sizes = [8, 32], strides = [1, 1]} : vector<16x32xf32> to vector<8x32xf32>
    %12 = vector.extract_strided_slice %9 {offsets = [0, 0], sizes = [8, 32], strides = [1, 1]} : vector<16x32xf32> to vector<8x32xf32>
    %13 = vector.extract_strided_slice %1 {offsets = [0, 0], sizes = [1, 8], strides = [1, 1]} : vector<2x8xf32> to vector<1x8xf32>
    %14 = vector.shape_cast %13 : vector<1x8xf32> to vector<1x8xf32>
    %15 = vector.broadcast %14 : vector<1x8xf32> to vector<8x8xf32>
    %16 = vector.extract_strided_slice %10 {offsets = [0, 0], sizes = [8, 8], strides = [1, 1]} : vector<8x32xf32> to vector<8x8xf32>
    %17 = vector.extract_strided_slice %11 {offsets = [0, 0], sizes = [8, 8], strides = [1, 1]} : vector<8x32xf32> to vector<8x8xf32>
    %18 = vector.extract_strided_slice %12 {offsets = [0, 0], sizes = [8, 8], strides = [1, 1]} : vector<8x32xf32> to vector<8x8xf32>
    %19 = tpu.transpose %17, [1, 0] : vector<8x8xf32> -> vector<8x8xf32>
    %cst_7 = arith.constant dense<0.000000e+00> : vector<8x8xf32>
    %20 = tpu.matmul %16, %19, %cst_7 {dimension_numbers = #tpu.dot_dimension_numbers<[1], [0], [0], [1], [0, 0, 1, 1], [], []>} : vector<8x8xf32>, vector<8x8xf32>, vector<8x8xf32> -> vector<8x8xf32>
    %cst_8 = arith.constant 0.353553385 : f32
    %21 = vector.broadcast %cst_8 : f32 to vector<8x8xf32>
    %22 = arith.mulf %20, %21 : vector<8x8xf32>
    %23 = arith.addf %22, %15 : vector<8x8xf32>
    %cst_9 = arith.constant dense<0xFF800000> : vector<8xf32>
    %24 = vector.multi_reduction <maximumf>, %23, %cst_9 [1] : vector<8x8xf32> to vector<8xf32>
    %25 = vector.shape_cast %24 : vector<8xf32> to vector<8x1xf32>
    %26 = vector.broadcast %25 : vector<8x1xf32> to vector<8x8xf32>
    %27 = arith.subf %23, %26 : vector<8x8xf32>
    %28 = math.exp %27 : vector<8x8xf32>
    %cst_10 = arith.constant dense<0.000000e+00> : vector<8xf32>
    %29 = vector.multi_reduction <add>, %28, %cst_10 [1] : vector<8x8xf32> to vector<8xf32>
    %30 = vector.shape_cast %29 : vector<8xf32> to vector<8x1xf32>
    %31 = tpu.reciprocal %30 {approx = true} : vector<8x1xf32> -> vector<8x1xf32>
    %32 = vector.broadcast %31 : vector<8x1xf32> to vector<8x8xf32>
    %33 = arith.mulf %28, %32 : vector<8x8xf32>
    %cst_11 = arith.constant dense<0.000000e+00> : vector<8x8xf32>
    %34 = tpu.matmul %33, %18, %cst_11 {dimension_numbers = #tpu.dot_dimension_numbers<[1], [0], [0], [1], [0, 0, 1, 1], [], []>} : vector<8x8xf32>, vector<8x8xf32>, vector<8x8xf32> -> vector<8x8xf32>
    %c0_12 = arith.constant 0 : index
    %c0_13 = arith.constant 0 : index
    %35 = vector.load %arg15[%c0_12, %c0_13] : memref<16x32xf32, #tpu.memory_space<vmem>>, vector<8x8xf32>
    tpu.vector_store %arg15[%c0_12, %c0_13], %34 {strides = array<i32>} : memref<16x32xf32, #tpu.memory_space<vmem>>, vector<8x8xf32>,
    %36 = vector.extract_strided_slice %10 {offsets = [0, 8], sizes = [8, 8], strides = [1, 1]} : vector<8x32xf32> to vector<8x8xf32>
    %37 = vector.extract_strided_slice %11 {offsets = [0, 8], sizes = [8, 8], strides = [1, 1]} : vector<8x32xf32> to vector<8x8xf32>
    %38 = vector.extract_strided_slice %12 {offsets = [0, 8], sizes = [8, 8], strides = [1, 1]} : vector<8x32xf32> to vector<8x8xf32>
    %39 = tpu.transpose %37, [1, 0] : vector<8x8xf32> -> vector<8x8xf32>
    %cst_14 = arith.constant dense<0.000000e+00> : vector<8x8xf32>
    %40 = tpu.matmul %36, %39, %cst_14 {dimension_numbers = #tpu.dot_dimension_numbers<[1], [0], [0], [1], [0, 0, 1, 1], [], []>} : vector<8x8xf32>, vector<8x8xf32>, vector<8x8xf32> -> vector<8x8xf32>
    %cst_15 = arith.constant 0.353553385 : f32
    %41 = vector.broadcast %cst_15 : f32 to vector<8x8xf32>
    %42 = arith.mulf %40, %41 : vector<8x8xf32>
    %43 = arith.addf %42, %15 : vector<8x8xf32>
    %cst_16 = arith.constant dense<0xFF800000> : vector<8xf32>
    %44 = vector.multi_reduction <maximumf>, %43, %cst_16 [1] : vector<8x8xf32> to vector<8xf32>
    %45 = vector.shape_cast %44 : vector<8xf32> to vector<8x1xf32>
    %46 = vector.broadcast %45 : vector<8x1xf32> to vector<8x8xf32>
    %47 = arith.subf %43, %46 : vector<8x8xf32>
    %48 = math.exp %47 : vector<8x8xf32>
    %cst_17 = arith.constant dense<0.000000e+00> : vector<8xf32>
    %49 = vector.multi_reduction <add>, %48, %cst_17 [1] : vector<8x8xf32> to vector<8xf32>
    %50 = vector.shape_cast %49 : vector<8xf32> to vector<8x1xf32>
    %51 = tpu.reciprocal %50 {approx = true} : vector<8x1xf32> -> vector<8x1xf32>
    %52 = vector.broadcast %51 : vector<8x1xf32> to vector<8x8xf32>
    %53 = arith.mulf %48, %52 : vector<8x8xf32>
    %cst_18 = arith.constant dense<0.000000e+00> : vector<8x8xf32>
    %54 = tpu.matmul %53, %38, %cst_18 {dimension_numbers = #tpu.dot_dimension_numbers<[1], [0], [0], [1], [0, 0, 1, 1], [], []>} : vector<8x8xf32>, vector<8x8xf32>, vector<8x8xf32> -> vector<8x8xf32>
    %c0_19 = arith.constant 0 : index
    %c8 = arith.constant 8 : index
    %55 = vector.load %arg15[%c0_19, %c8] : memref<16x32xf32, #tpu.memory_space<vmem>>, vector<8x8xf32>
    tpu.vector_store %arg15[%c0_19, %c8], %54 {strides = array<i32>} : memref<16x32xf32, #tpu.memory_space<vmem>>, vector<8x8xf32>,
    %56 = vector.extract_strided_slice %10 {offsets = [0, 16], sizes = [8, 8], strides = [1, 1]} : vector<8x32xf32> to vector<8x8xf32>
    %57 = vector.extract_strided_slice %11 {offsets = [0, 16], sizes = [8, 8], strides = [1, 1]} : vector<8x32xf32> to vector<8x8xf32>
    %58 = vector.extract_strided_slice %12 {offsets = [0, 16], sizes = [8, 8], strides = [1, 1]} : vector<8x32xf32> to vector<8x8xf32>
    %59 = tpu.transpose %57, [1, 0] : vector<8x8xf32> -> vector<8x8xf32>
    %cst_20 = arith.constant dense<0.000000e+00> : vector<8x8xf32>
    %60 = tpu.matmul %56, %59, %cst_20 {dimension_numbers = #tpu.dot_dimension_numbers<[1], [0], [0], [1], [0, 0, 1, 1], [], []>} : vector<8x8xf32>, vector<8x8xf32>, vector<8x8xf32> -> vector<8x8xf32>
    %cst_21 = arith.constant 0.353553385 : f32
    %61 = vector.broadcast %cst_21 : f32 to vector<8x8xf32>
    %62 = arith.mulf %60, %61 : vector<8x8xf32>
    %63 = arith.addf %62, %15 : vector<8x8xf32>
    %cst_22 = arith.constant dense<0xFF800000> : vector<8xf32>
    %64 = vector.multi_reduction <maximumf>, %63, %cst_22 [1] : vector<8x8xf32> to vector<8xf32>
    %65 = vector.shape_cast %64 : vector<8xf32> to vector<8x1xf32>
    %66 = vector.broadcast %65 : vector<8x1xf32> to vector<8x8xf32>
    %67 = arith.subf %63, %66 : vector<8x8xf32>
    %68 = math.exp %67 : vector<8x8xf32>
    %cst_23 = arith.constant dense<0.000000e+00> : vector<8xf32>
    %69 = vector.multi_reduction <add>, %68, %cst_23 [1] : vector<8x8xf32> to vector<8xf32>
    %70 = vector.shape_cast %69 : vector<8xf32> to vector<8x1xf32>
    %71 = tpu.reciprocal %70 {approx = true} : vector<8x1xf32> -> vector<8x1xf32>
    %72 = vector.broadcast %71 : vector<8x1xf32> to vector<8x8xf32>
    %73 = arith.mulf %68, %72 : vector<8x8xf32>
    %cst_24 = arith.constant dense<0.000000e+00> : vector<8x8xf32>
    %74 = tpu.matmul %73, %58, %cst_24 {dimension_numbers = #tpu.dot_dimension_numbers<[1], [0], [0], [1], [0, 0, 1, 1], [], []>} : vector<8x8xf32>, vector<8x8xf32>, vector<8x8xf32> -> vector<8x8xf32>
    %c0_25 = arith.constant 0 : index
    %c16 = arith.constant 16 : index
    %75 = vector.load %arg15[%c0_25, %c16] : memref<16x32xf32, #tpu.memory_space<vmem>>, vector<8x8xf32>
    tpu.vector_store %arg15[%c0_25, %c16], %74 {strides = array<i32>} : memref<16x32xf32, #tpu.memory_space<vmem>>, vector<8x8xf32>,
    %76 = vector.extract_strided_slice %10 {offsets = [0, 24], sizes = [8, 8], strides = [1, 1]} : vector<8x32xf32> to vector<8x8xf32>
    %77 = vector.extract_strided_slice %11 {offsets = [0, 24], sizes = [8, 8], strides = [1, 1]} : vector<8x32xf32> to vector<8x8xf32>
    %78 = vector.extract_strided_slice %12 {offsets = [0, 24], sizes = [8, 8], strides = [1, 1]} : vector<8x32xf32> to vector<8x8xf32>
    %79 = tpu.transpose %77, [1, 0] : vector<8x8xf32> -> vector<8x8xf32>
    %cst_26 = arith.constant dense<0.000000e+00> : vector<8x8xf32>
    %80 = tpu.matmul %76, %79, %cst_26 {dimension_numbers = #tpu.dot_dimension_numbers<[1], [0], [0], [1], [0, 0, 1, 1], [], []>} : vector<8x8xf32>, vector<8x8xf32>, vector<8x8xf32> -> vector<8x8xf32>
    %cst_27 = arith.constant 0.353553385 : f32
    %81 = vector.broadcast %cst_27 : f32 to vector<8x8xf32>
    %82 = arith.mulf %80, %81 : vector<8x8xf32>
    %83 = arith.addf %82, %15 : vector<8x8xf32>
    %cst_28 = arith.constant dense<0xFF800000> : vector<8xf32>
    %84 = vector.multi_reduction <maximumf>, %83, %cst_28 [1] : vector<8x8xf32> to vector<8xf32>
    %85 = vector.shape_cast %84 : vector<8xf32> to vector<8x1xf32>
    %86 = vector.broadcast %85 : vector<8x1xf32> to vector<8x8xf32>
    %87 = arith.subf %83, %86 : vector<8x8xf32>
    %88 = math.exp %87 : vector<8x8xf32>
    %cst_29 = arith.constant dense<0.000000e+00> : vector<8xf32>
    %89 = vector.multi_reduction <add>, %88, %cst_29 [1] : vector<8x8xf32> to vector<8xf32>
    %90 = vector.shape_cast %89 : vector<8xf32> to vector<8x1xf32>
    %91 = tpu.reciprocal %90 {approx = true} : vector<8x1xf32> -> vector<8x1xf32>
    %92 = vector.broadcast %91 : vector<8x1xf32> to vector<8x8xf32>
    %93 = arith.mulf %88, %92 : vector<8x8xf32>
    %cst_30 = arith.constant dense<0.000000e+00> : vector<8x8xf32>
    %94 = tpu.matmul %93, %78, %cst_30 {dimension_numbers = #tpu.dot_dimension_numbers<[1], [0], [0], [1], [0, 0, 1, 1], [], []>} : vector<8x8xf32>, vector<8x8xf32>, vector<8x8xf32> -> vector<8x8xf32>
    %c0_31 = arith.constant 0 : index
    %c24 = arith.constant 24 : index
    %95 = vector.load %arg15[%c0_31, %c24] : memref<16x32xf32, #tpu.memory_space<vmem>>, vector<8x8xf32>
    tpu.vector_store %arg15[%c0_31, %c24], %94 {strides = array<i32>} : memref<16x32xf32, #tpu.memory_space<vmem>>, vector<8x8xf32>,
    %96 = vector.extract_strided_slice %7 {offsets = [8, 0], sizes = [8, 32], strides = [1, 1]} : vector<16x32xf32> to vector<8x32xf32>
    %97 = vector.extract_strided_slice %8 {offsets = [8, 0], sizes = [8, 32], strides = [1, 1]} : vector<16x32xf32> to vector<8x32xf32>
    %98 = vector.extract_strided_slice %9 {offsets = [8, 0], sizes = [8, 32], strides = [1, 1]} : vector<16x32xf32> to vector<8x32xf32>
    %99 = vector.extract_strided_slice %1 {offsets = [1, 0], sizes = [1, 8], strides = [1, 1]} : vector<2x8xf32> to vector<1x8xf32>
    %100 = vector.shape_cast %99 : vector<1x8xf32> to vector<1x8xf32>
    %101 = vector.broadcast %100 : vector<1x8xf32> to vector<8x8xf32>
    %102 = vector.extract_strided_slice %96 {offsets = [0, 0], sizes = [8, 8], strides = [1, 1]} : vector<8x32xf32> to vector<8x8xf32>
    %103 = vector.extract_strided_slice %97 {offsets = [0, 0], sizes = [8, 8], strides = [1, 1]} : vector<8x32xf32> to vector<8x8xf32>
    %104 = vector.extract_strided_slice %98 {offsets = [0, 0], sizes = [8, 8], strides = [1, 1]} : vector<8x32xf32> to vector<8x8xf32>
    %105 = tpu.transpose %103, [1, 0] : vector<8x8xf32> -> vector<8x8xf32>
    %cst_32 = arith.constant dense<0.000000e+00> : vector<8x8xf32>
    %106 = tpu.matmul %102, %105, %cst_32 {dimension_numbers = #tpu.dot_dimension_numbers<[1], [0], [0], [1], [0, 0, 1, 1], [], []>} : vector<8x8xf32>, vector<8x8xf32>, vector<8x8xf32> -> vector<8x8xf32>
    %cst_33 = arith.constant 0.353553385 : f32
    %107 = vector.broadcast %cst_33 : f32 to vector<8x8xf32>
    %108 = arith.mulf %106, %107 : vector<8x8xf32>
    %109 = arith.addf %108, %101 : vector<8x8xf32>
    %cst_34 = arith.constant dense<0xFF800000> : vector<8xf32>
    %110 = vector.multi_reduction <maximumf>, %109, %cst_34 [1] : vector<8x8xf32> to vector<8xf32>
    %111 = vector.shape_cast %110 : vector<8xf32> to vector<8x1xf32>
    %112 = vector.broadcast %111 : vector<8x1xf32> to vector<8x8xf32>
    %113 = arith.subf %109, %112 : vector<8x8xf32>
    %114 = math.exp %113 : vector<8x8xf32>
    %cst_35 = arith.constant dense<0.000000e+00> : vector<8xf32>
    %115 = vector.multi_reduction <add>, %114, %cst_35 [1] : vector<8x8xf32> to vector<8xf32>
    %116 = vector.shape_cast %115 : vector<8xf32> to vector<8x1xf32>
    %117 = tpu.reciprocal %116 {approx = true} : vector<8x1xf32> -> vector<8x1xf32>
    %118 = vector.broadcast %117 : vector<8x1xf32> to vector<8x8xf32>
    %119 = arith.mulf %114, %118 : vector<8x8xf32>
    %cst_36 = arith.constant dense<0.000000e+00> : vector<8x8xf32>
    %120 = tpu.matmul %119, %104, %cst_36 {dimension_numbers = #tpu.dot_dimension_numbers<[1], [0], [0], [1], [0, 0, 1, 1], [], []>} : vector<8x8xf32>, vector<8x8xf32>, vector<8x8xf32> -> vector<8x8xf32>
    %c8_37 = arith.constant 8 : index
    %c0_38 = arith.constant 0 : index
    %121 = vector.load %arg15[%c8_37, %c0_38] : memref<16x32xf32, #tpu.memory_space<vmem>>, vector<8x8xf32>
    tpu.vector_store %arg15[%c8_37, %c0_38], %120 {strides = array<i32>} : memref<16x32xf32, #tpu.memory_space<vmem>>, vector<8x8xf32>,
    %122 = vector.extract_strided_slice %96 {offsets = [0, 8], sizes = [8, 8], strides = [1, 1]} : vector<8x32xf32> to vector<8x8xf32>
    %123 = vector.extract_strided_slice %97 {offsets = [0, 8], sizes = [8, 8], strides = [1, 1]} : vector<8x32xf32> to vector<8x8xf32>
    %124 = vector.extract_strided_slice %98 {offsets = [0, 8], sizes = [8, 8], strides = [1, 1]} : vector<8x32xf32> to vector<8x8xf32>
    %125 = tpu.transpose %123, [1, 0] : vector<8x8xf32> -> vector<8x8xf32>
    %cst_39 = arith.constant dense<0.000000e+00> : vector<8x8xf32>
    %126 = tpu.matmul %122, %125, %cst_39 {dimension_numbers = #tpu.dot_dimension_numbers<[1], [0], [0], [1], [0, 0, 1, 1], [], []>} : vector<8x8xf32>, vector<8x8xf32>, vector<8x8xf32> -> vector<8x8xf32>
    %cst_40 = arith.constant 0.353553385 : f32
    %127 = vector.broadcast %cst_40 : f32 to vector<8x8xf32>
    %128 = arith.mulf %126, %127 : vector<8x8xf32>
    %129 = arith.addf %128, %101 : vector<8x8xf32>
    %cst_41 = arith.constant dense<0xFF800000> : vector<8xf32>
    %130 = vector.multi_reduction <maximumf>, %129, %cst_41 [1] : vector<8x8xf32> to vector<8xf32>
    %131 = vector.shape_cast %130 : vector<8xf32> to vector<8x1xf32>
    %132 = vector.broadcast %131 : vector<8x1xf32> to vector<8x8xf32>
    %133 = arith.subf %129, %132 : vector<8x8xf32>
    %134 = math.exp %133 : vector<8x8xf32>
    %cst_42 = arith.constant dense<0.000000e+00> : vector<8xf32>
    %135 = vector.multi_reduction <add>, %134, %cst_42 [1] : vector<8x8xf32> to vector<8xf32>
    %136 = vector.shape_cast %135 : vector<8xf32> to vector<8x1xf32>
    %137 = tpu.reciprocal %136 {approx = true} : vector<8x1xf32> -> vector<8x1xf32>
    %138 = vector.broadcast %137 : vector<8x1xf32> to vector<8x8xf32>
    %139 = arith.mulf %134, %138 : vector<8x8xf32>
    %cst_43 = arith.constant dense<0.000000e+00> : vector<8x8xf32>
    %140 = tpu.matmul %139, %124, %cst_43 {dimension_numbers = #tpu.dot_dimension_numbers<[1], [0], [0], [1], [0, 0, 1, 1], [], []>} : vector<8x8xf32>, vector<8x8xf32>, vector<8x8xf32> -> vector<8x8xf32>
    %c8_44 = arith.constant 8 : index
    %c8_45 = arith.constant 8 : index
    %141 = vector.load %arg15[%c8_44, %c8_45] : memref<16x32xf32, #tpu.memory_space<vmem>>, vector<8x8xf32>
    tpu.vector_store %arg15[%c8_44, %c8_45], %140 {strides = array<i32>} : memref<16x32xf32, #tpu.memory_space<vmem>>, vector<8x8xf32>,
    %142 = vector.extract_strided_slice %96 {offsets = [0, 16], sizes = [8, 8], strides = [1, 1]} : vector<8x32xf32> to vector<8x8xf32>
    %143 = vector.extract_strided_slice %97 {offsets = [0, 16], sizes = [8, 8], strides = [1, 1]} : vector<8x32xf32> to vector<8x8xf32>
    %144 = vector.extract_strided_slice %98 {offsets = [0, 16], sizes = [8, 8], strides = [1, 1]} : vector<8x32xf32> to vector<8x8xf32>
    %145 = tpu.transpose %143, [1, 0] : vector<8x8xf32> -> vector<8x8xf32>
    %cst_46 = arith.constant dense<0.000000e+00> : vector<8x8xf32>
    %146 = tpu.matmul %142, %145, %cst_46 {dimension_numbers = #tpu.dot_dimension_numbers<[1], [0], [0], [1], [0, 0, 1, 1], [], []>} : vector<8x8xf32>, vector<8x8xf32>, vector<8x8xf32> -> vector<8x8xf32>
    %cst_47 = arith.constant 0.353553385 : f32
    %147 = vector.broadcast %cst_47 : f32 to vector<8x8xf32>
    %148 = arith.mulf %146, %147 : vector<8x8xf32>
    %149 = arith.addf %148, %101 : vector<8x8xf32>
    %cst_48 = arith.constant dense<0xFF800000> : vector<8xf32>
    %150 = vector.multi_reduction <maximumf>, %149, %cst_48 [1] : vector<8x8xf32> to vector<8xf32>
    %151 = vector.shape_cast %150 : vector<8xf32> to vector<8x1xf32>
    %152 = vector.broadcast %151 : vector<8x1xf32> to vector<8x8xf32>
    %153 = arith.subf %149, %152 : vector<8x8xf32>
    %154 = math.exp %153 : vector<8x8xf32>
    %cst_49 = arith.constant dense<0.000000e+00> : vector<8xf32>
    %155 = vector.multi_reduction <add>, %154, %cst_49 [1] : vector<8x8xf32> to vector<8xf32>
    %156 = vector.shape_cast %155 : vector<8xf32> to vector<8x1xf32>
    %157 = tpu.reciprocal %156 {approx = true} : vector<8x1xf32> -> vector<8x1xf32>
    %158 = vector.broadcast %157 : vector<8x1xf32> to vector<8x8xf32>
    %159 = arith.mulf %154, %158 : vector<8x8xf32>
    %cst_50 = arith.constant dense<0.000000e+00> : vector<8x8xf32>
    %160 = tpu.matmul %159, %144, %cst_50 {dimension_numbers = #tpu.dot_dimension_numbers<[1], [0], [0], [1], [0, 0, 1, 1], [], []>} : vector<8x8xf32>, vector<8x8xf32>, vector<8x8xf32> -> vector<8x8xf32>
    %c8_51 = arith.constant 8 : index
    %c16_52 = arith.constant 16 : index
    %161 = vector.load %arg15[%c8_51, %c16_52] : memref<16x32xf32, #tpu.memory_space<vmem>>, vector<8x8xf32>
    tpu.vector_store %arg15[%c8_51, %c16_52], %160 {strides = array<i32>} : memref<16x32xf32, #tpu.memory_space<vmem>>, vector<8x8xf32>,
    %162 = vector.extract_strided_slice %96 {offsets = [0, 24], sizes = [8, 8], strides = [1, 1]} : vector<8x32xf32> to vector<8x8xf32>
    %163 = vector.extract_strided_slice %97 {offsets = [0, 24], sizes = [8, 8], strides = [1, 1]} : vector<8x32xf32> to vector<8x8xf32>
    %164 = vector.extract_strided_slice %98 {offsets = [0, 24], sizes = [8, 8], strides = [1, 1]} : vector<8x32xf32> to vector<8x8xf32>
    %165 = tpu.transpose %163, [1, 0] : vector<8x8xf32> -> vector<8x8xf32>
    %cst_53 = arith.constant dense<0.000000e+00> : vector<8x8xf32>
    %166 = tpu.matmul %162, %165, %cst_53 {dimension_numbers = #tpu.dot_dimension_numbers<[1], [0], [0], [1], [0, 0, 1, 1], [], []>} : vector<8x8xf32>, vector<8x8xf32>, vector<8x8xf32> -> vector<8x8xf32>
    %cst_54 = arith.constant 0.353553385 : f32
    %167 = vector.broadcast %cst_54 : f32 to vector<8x8xf32>
    %168 = arith.mulf %166, %167 : vector<8x8xf32>
    %169 = arith.addf %168, %101 : vector<8x8xf32>
    %cst_55 = arith.constant dense<0xFF800000> : vector<8xf32>
    %170 = vector.multi_reduction <maximumf>, %169, %cst_55 [1] : vector<8x8xf32> to vector<8xf32>
    %171 = vector.shape_cast %170 : vector<8xf32> to vector<8x1xf32>
    %172 = vector.broadcast %171 : vector<8x1xf32> to vector<8x8xf32>
    %173 = arith.subf %169, %172 : vector<8x8xf32>
    %174 = math.exp %173 : vector<8x8xf32>
    %cst_56 = arith.constant dense<0.000000e+00> : vector<8xf32>
    %175 = vector.multi_reduction <add>, %174, %cst_56 [1] : vector<8x8xf32> to vector<8xf32>
    %176 = vector.shape_cast %175 : vector<8xf32> to vector<8x1xf32>
    %177 = tpu.reciprocal %176 {approx = true} : vector<8x1xf32> -> vector<8x1xf32>
    %178 = vector.broadcast %177 : vector<8x1xf32> to vector<8x8xf32>
    %179 = arith.mulf %174, %178 : vector<8x8xf32>
    %cst_57 = arith.constant dense<0.000000e+00> : vector<8x8xf32>
    %180 = tpu.matmul %179, %164, %cst_57 {dimension_numbers = #tpu.dot_dimension_numbers<[1], [0], [0], [1], [0, 0, 1, 1], [], []>} : vector<8x8xf32>, vector<8x8xf32>, vector<8x8xf32> -> vector<8x8xf32>
    %c8_58 = arith.constant 8 : index
    %c24_59 = arith.constant 24 : index
    %181 = vector.load %arg15[%c8_58, %c24_59] : memref<16x32xf32, #tpu.memory_space<vmem>>, vector<8x8xf32>
    tpu.vector_store %arg15[%c8_58, %c24_59], %180 {strides = array<i32>} : memref<16x32xf32, #tpu.memory_space<vmem>>, vector<8x8xf32>,
    %c0_60 = arith.constant 0 : index
    %c0_61 = arith.constant 0 : index
    %182 = vector.load %arg15[%c0_60, %c0_61] : memref<16x32xf32, #tpu.memory_space<vmem>>, vector<16x32xf32>
    %c0_62 = arith.constant 0 : index
    %c0_63 = arith.constant 0 : index
    %183 = vector.load %arg4[%c0_62, %c0_63] : memref<32x32xf32, #tpu.memory_space<vmem>>, vector<32x32xf32>
    %cst_64 = arith.constant dense<0.000000e+00> : vector<16x32xf32>
    %184 = tpu.matmul %182, %183, %cst_64 {dimension_numbers = #tpu.dot_dimension_numbers<[1], [0], [0], [1], [0, 0, 1, 1], [], []>} : vector<16x32xf32>, vector<32x32xf32>, vector<16x32xf32> -> vector<16x32xf32>
    %c0_65 = arith.constant 0 : index
    %c0_66 = arith.constant 0 : index
    %185 = vector.load %arg5[%c0_65, %c0_66] : memref<1x32xf32, #tpu.memory_space<vmem>>, vector<1x32xf32>
    %186 = vector.broadcast %185 : vector<1x32xf32> to vector<16x32xf32>
    %187 = arith.addf %184, %186 : vector<16x32xf32>
    %188 = arith.addf %187, %0 : vector<16x32xf32>
    %c0_67 = arith.constant 0 : index
    %c0_68 = arith.constant 0 : index
    %189 = vector.load %arg6[%c0_67, %c0_68] : memref<1x32xf32, #tpu.memory_space<vmem>>, vector<1x32xf32>
    %c0_69 = arith.constant 0 : index
    %c0_70 = arith.constant 0 : index
    %190 = vector.load %arg7[%c0_69, %c0_70] : memref<1x32xf32, #tpu.memory_space<vmem>>, vector<1x32xf32>
    %cst_71 = arith.constant dense<0.000000e+00> : vector<16xf32>
    %191 = vector.multi_reduction <add>, %188, %cst_71 [1] : vector<16x32xf32> to vector<16xf32>
    %192 = vector.shape_cast %191 : vector<16xf32> to vector<16x1xf32>
    %cst_72 = arith.constant 3.200000e+01 : f32
    %193 = vector.broadcast %cst_72 : f32 to vector<16x1xf32>
    %194 = arith.divf %192, %193 : vector<16x1xf32>
    %195 = vector.broadcast %194 : vector<16x1xf32> to vector<16x32xf32>
    %196 = arith.subf %188, %195 : vector<16x32xf32>
    %197 = arith.mulf %196, %196 : vector<16x32xf32>
    %cst_73 = arith.constant dense<0.000000e+00> : vector<16xf32>
    %198 = vector.multi_reduction <add>, %197, %cst_73 [1] : vector<16x32xf32> to vector<16xf32>
    %199 = vector.shape_cast %198 : vector<16xf32> to vector<16x1xf32>
    %cst_74 = arith.constant 3.200000e+01 : f32
    %200 = vector.broadcast %cst_74 : f32 to vector<16x1xf32>
    %201 = arith.divf %199, %200 : vector<16x1xf32>
    %cst_75 = arith.constant 9.99999996E-13 : f32
    %202 = vector.broadcast %cst_75 : f32 to vector<16x1xf32>
    %203 = arith.addf %201, %202 : vector<16x1xf32>
    %204 = math.rsqrt %203 : vector<16x1xf32>
    %205 = vector.broadcast %204 : vector<16x1xf32> to vector<16x32xf32>
    %206 = arith.mulf %196, %205 : vector<16x32xf32>
    %207 = vector.broadcast %189 : vector<1x32xf32> to vector<16x32xf32>
    %208 = arith.mulf %207, %206 : vector<16x32xf32>
    %209 = vector.broadcast %190 : vector<1x32xf32> to vector<16x32xf32>
    %210 = arith.addf %208, %209 : vector<16x32xf32>
    %c0_76 = arith.constant 0 : index
    %c0_77 = arith.constant 0 : index
    %211 = vector.load %arg8[%c0_76, %c0_77] : memref<32x64xf32, #tpu.memory_space<vmem>>, vector<32x64xf32>
    %cst_78 = arith.constant dense<0.000000e+00> : vector<16x64xf32>
    %212 = tpu.matmul %210, %211, %cst_78 {dimension_numbers = #tpu.dot_dimension_numbers<[1], [0], [0], [1], [0, 0, 1, 1], [], []>} : vector<16x32xf32>, vector<32x64xf32>, vector<16x64xf32> -> vector<16x64xf32>
    %c0_79 = arith.constant 0 : index
    %c0_80 = arith.constant 0 : index
    %213 = vector.load %arg9[%c0_79, %c0_80] : memref<1x64xf32, #tpu.memory_space<vmem>>, vector<1x64xf32>
    %214 = vector.broadcast %213 : vector<1x64xf32> to vector<16x64xf32>
    %215 = arith.addf %212, %214 : vector<16x64xf32>
    %cst_81 = arith.constant 5.000000e-01 : f32
    %216 = vector.broadcast %cst_81 : f32 to vector<16x64xf32>
    %217 = arith.mulf %215, %216 : vector<16x64xf32>
    %cst_82 = arith.constant 1.41421354 : f32
    %218 = vector.broadcast %cst_82 : f32 to vector<16x64xf32>
    %219 = arith.divf %215, %218 : vector<16x64xf32>
    %220 = math.absf %219 : vector<16x64xf32>
    %cst_83 = arith.constant 0.327591091 : f32
    %221 = vector.broadcast %cst_83 : f32 to vector<16x64xf32>
    %222 = arith.mulf %221, %220 : vector<16x64xf32>
    %cst_84 = arith.constant 1.000000e+00 : f32
    %223 = vector.broadcast %cst_84 : f32 to vector<16x64xf32>
    %224 = arith.addf %223, %222 : vector<16x64xf32>
    %cst_85 = arith.constant 1.000000e+00 : f32
    %225 = vector.broadcast %cst_85 : f32 to vector<16x64xf32>
    %226 = arith.divf %225, %224 : vector<16x64xf32>
    %cst_86 = arith.constant 1.06140542 : f32
    %227 = vector.broadcast %cst_86 : f32 to vector<16x64xf32>
    %228 = arith.mulf %227, %226 : vector<16x64xf32>
    %cst_87 = arith.constant -1.45315206 : f32
    %229 = vector.broadcast %cst_87 : f32 to vector<16x64xf32>
    %230 = arith.addf %228, %229 : vector<16x64xf32>
    %231 = arith.mulf %230, %226 : vector<16x64xf32>
    %cst_88 = arith.constant 1.42141378 : f32
    %232 = vector.broadcast %cst_88 : f32 to vector<16x64xf32>
    %233 = arith.addf %231, %232 : vector<16x64xf32>
    %234 = arith.mulf %233, %226 : vector<16x64xf32>
    %cst_89 = arith.constant -0.284496725 : f32
    %235 = vector.broadcast %cst_89 : f32 to vector<16x64xf32>
    %236 = arith.addf %234, %235 : vector<16x64xf32>
    %237 = arith.mulf %236, %226 : vector<16x64xf32>
    %cst_90 = arith.constant 0.254829586 : f32
    %238 = vector.broadcast %cst_90 : f32 to vector<16x64xf32>
    %239 = arith.addf %237, %238 : vector<16x64xf32>
    %240 = arith.mulf %239, %226 : vector<16x64xf32>
    %cst_91 = arith.constant 0.000000e+00 : f32
    %241 = vector.broadcast %cst_91 : f32 to vector<16x64xf32>
    %242 = arith.subf %241, %220 : vector<16x64xf32>
    %243 = arith.mulf %242, %220 : vector<16x64xf32>
    %244 = math.exp %243 : vector<16x64xf32>
    %245 = arith.mulf %240, %244 : vector<16x64xf32>
    %cst_92 = arith.constant 1.000000e+00 : f32
    %246 = vector.broadcast %cst_92 : f32 to vector<16x64xf32>
    %247 = arith.subf %246, %245 : vector<16x64xf32>
    %cst_93 = arith.constant 0.000000e+00 : f32
    %248 = vector.broadcast %cst_93 : f32 to vector<16x64xf32>
    %249 = arith.cmpf oge, %219, %248 : vector<16x64xf32>
    %cst_94 = arith.constant 0.000000e+00 : f32
    %250 = vector.broadcast %cst_94 : f32 to vector<16x64xf32>
    %251 = arith.subf %250, %247 : vector<16x64xf32>
    %252 = arith.select %249, %247, %251 : vector<16x64xi1>, vector<16x64xf32>
    %cst_95 = arith.constant 1.000000e+00 : f32
    %253 = vector.broadcast %cst_95 : f32 to vector<16x64xf32>
    %254 = arith.addf %253, %252 : vector<16x64xf32>
    %255 = arith.mulf %217, %254 : vector<16x64xf32>
    %c0_96 = arith.constant 0 : index
    %c0_97 = arith.constant 0 : index
    %256 = vector.load %arg10[%c0_96, %c0_97] : memref<64x32xf32, #tpu.memory_space<vmem>>, vector<64x32xf32>
    %cst_98 = arith.constant dense<0.000000e+00> : vector<16x32xf32>
    %257 = tpu.matmul %255, %256, %cst_98 {dimension_numbers = #tpu.dot_dimension_numbers<[1], [0], [0], [1], [0, 0, 1, 1], [], []>} : vector<16x64xf32>, vector<64x32xf32>, vector<16x32xf32> -> vector<16x32xf32>
    %c0_99 = arith.constant 0 : index
    %c0_100 = arith.constant 0 : index
    %258 = vector.load %arg11[%c0_99, %c0_100] : memref<1x32xf32, #tpu.memory_space<vmem>>, vector<1x32xf32>
    %259 = vector.broadcast %258 : vector<1x32xf32> to vector<16x32xf32>
    %260 = arith.addf %257, %259 : vector<16x32xf32>
    %261 = arith.addf %260, %210 : vector<16x32xf32>
    %c0_101 = arith.constant 0 : index
    %c0_102 = arith.constant 0 : index
    %262 = vector.load %arg12[%c0_101, %c0_102] : memref<1x32xf32, #tpu.memory_space<vmem>>, vector<1x32xf32>
    %c0_103 = arith.constant 0 : index
    %c0_104 = arith.constant 0 : index
    %263 = vector.load %arg13[%c0_103, %c0_104] : memref<1x32xf32, #tpu.memory_space<vmem>>, vector<1x32xf32>
    %cst_105 = arith.constant dense<0.000000e+00> : vector<16xf32>
    %264 = vector.multi_reduction <add>, %261, %cst_105 [1] : vector<16x32xf32> to vector<16xf32>
    %265 = vector.shape_cast %264 : vector<16xf32> to vector<16x1xf32>
    %cst_106 = arith.constant 3.200000e+01 : f32
    %266 = vector.broadcast %cst_106 : f32 to vector<16x1xf32>
    %267 = arith.divf %265, %266 : vector<16x1xf32>
    %268 = vector.broadcast %267 : vector<16x1xf32> to vector<16x32xf32>
    %269 = arith.subf %261, %268 : vector<16x32xf32>
    %270 = arith.mulf %269, %269 : vector<16x32xf32>
    %cst_107 = arith.constant dense<0.000000e+00> : vector<16xf32>
    %271 = vector.multi_reduction <add>, %270, %cst_107 [1] : vector<16x32xf32> to vector<16xf32>
    %272 = vector.shape_cast %271 : vector<16xf32> to vector<16x1xf32>
    %cst_108 = arith.constant 3.200000e+01 : f32
    %273 = vector.broadcast %cst_108 : f32 to vector<16x1xf32>
    %274 = arith.divf %272, %273 : vector<16x1xf32>
    %cst_109 = arith.constant 9.99999996E-13 : f32
    %275 = vector.broadcast %cst_109 : f32 to vector<16x1xf32>
    %276 = arith.addf %274, %275 : vector<16x1xf32>
    %277 = math.rsqrt %276 : vector<16x1xf32>
    %278 = vector.broadcast %277 : vector<16x1xf32> to vector<16x32xf32>
    %279 = arith.mulf %269, %278 : vector<16x32xf32>
    %280 = vector.broadcast %262 : vector<1x32xf32> to vector<16x32xf32>
    %281 = arith.mulf %280, %279 : vector<16x32xf32>
    %282 = vector.broadcast %263 : vector<1x32xf32> to vector<16x32xf32>
    %283 = arith.addf %281, %282 : vector<16x32xf32>
    %c0_110 = arith.constant 0 : index
    %c0_111 = arith.constant 0 : index
    %284 = vector.load %arg14[%c0_110, %c0_111] : memref<16x32xf32, #tpu.memory_space<vmem>>, vector<16x32xf32>
    tpu.vector_store %arg14[%c0_110, %c0_111], %283 {strides = array<i32>} : memref<16x32xf32, #tpu.memory_space<vmem>>, vector<16x32xf32>,
    return
  }
}

</mosaic_0001>

<llo_original>
// kernel: tpu_custom_call.1
$region0: #{tpu_custom_call.1}
  #allocation0 [shape = 'u32[]', space=smem, size = 0x4, offset = 0x4, fixed_abs, tag = 'smem constant byte address 0x4 - core index']
  #allocation1 [shape = 'u32[144,128]{1,0:T(1,128)}', space=vmem, size = 0x12000, scoped, tag = 'internal scratch']
  #allocation2 [shape = 'f32[16,32]{1,0:T(8,128)}', space=vmem, size = 0x2000, scoped, tag = 'scratch operand']
  %s0 = inlined_call_operand.hbm [shape: f32[16,32], index: 0, kind: input, shape index: {}]
  %s1 = inlined_call_operand.vmem [shape: f32[2,8], index: 1, kind: input, shape index: {}]
  %s2 = inlined_call_operand.vmem [shape: f32[32,96], index: 2, kind: input, shape index: {}]
  %s3 = inlined_call_operand.vmem [shape: f32[1,96], index: 3, kind: input, shape index: {}]
  %s4 = inlined_call_operand.vmem [shape: f32[32,32], index: 4, kind: input, shape index: {}]
  %s5 = inlined_call_operand.vmem [shape: f32[1,32], index: 5, kind: input, shape index: {}]
  %s6 = inlined_call_operand.vmem [shape: f32[1,32], index: 6, kind: input, shape index: {}]
  %s7 = inlined_call_operand.hbm [shape: f32[1,32], index: 7, kind: input, shape index: {}]
  %s8 = inlined_call_operand.vmem [shape: f32[32,64], index: 8, kind: input, shape index: {}]
  %s9 = inlined_call_operand.hbm [shape: f32[1,64], index: 9, kind: input, shape index: {}]
  %s10 = inlined_call_operand.vmem [shape: f32[64,32], index: 10, kind: input, shape index: {}]
  %s11 = inlined_call_operand.vmem [shape: f32[1,32], index: 11, kind: input, shape index: {}]
  %s12 = inlined_call_operand.vmem [shape: f32[1,32], index: 12, kind: input, shape index: {}]
  %s13 = inlined_call_operand.vmem [shape: f32[1,32], index: 13, kind: input, shape index: {}]
  %s14 = inlined_call_operand.hbm [shape: f32[16,32], index: 14, kind: output, shape index: {}]
  %s15 = sld [smem:[#allocation0]]
  $region78: #{tpu_custom_call.1} parent=0
    _
  %s17 = ssub.s32 1, %s15
  %s18 = scalar_select 0, %s17, %s15
  $region1: #{tpu_custom_call.1} parent=0
    #allocation3 [shape = 'u8[8192]{0}', space=vmem, size = 0x2000, scoped, tag = 'input window, operand 0, single buffered']
    #allocation4 [shape = 's32[1]{0}', space=sflag, size = 0x4, scoped, tag = 'scoped memory for tpu_custom_call.1']
    #allocation5 [shape = 's32[1]{0}', space=sflag, size = 0x4, scoped, tag = 'scoped memory for tpu_custom_call.1']
    #allocation6 [shape = 'u8[512]{0}', space=vmem, size = 0x400, scoped, tag = 'input window, operand 7, single buffered']
    #allocation7 [shape = 's32[1]{0}', space=sflag, size = 0x4, scoped, tag = 'scoped memory for tpu_custom_call.1']
    #allocation8 [shape = 'u8[512]{0}', space=vmem, size = 0x400, scoped, tag = 'input window, operand 9, single buffered']
    #allocation9 [shape = 'u8[8192]{0}', space=vmem, size = 0x2000, scoped, tag = 'output window, operand 0, single buffered']
    %19 = vsyncpa [#allocation4], 0
    %20 = vsyncpa [#allocation7], 0
    %21 = vsyncpa [#allocation5], 0
    // Predicated region
    $region2: #{tpu_custom_call.1} parent=1 // pred_check
      _
    $region3: #{tpu_custom_call.1} parent=1 // pred_check_branch
      %23 = sbr.rel (0) target = $region5
    $region4: #{tpu_custom_call.1} parent=1 // pred_region
      %s25 = ssub.s32 256, 256
      %26 = vsyncadd [#allocation4], %s25
      %s27 = sshll.u32 [#allocation3], 4
      %s28 = int_to_ptr.vmem [resolvable:$true] %s27
      %33 = dma.hbm_to_vmem [thread:$0]  %s0, 256, %s28, [#allocation4], 128, 128, 8
    $region5: #{tpu_custom_call.1} parent=1 // pred_fallthru
      _
    // Predicated region
    $region6: #{tpu_custom_call.1} parent=1 // pred_check
      _
    $region7: #{tpu_custom_call.1} parent=1 // pred_check_branch
      %35 = sbr.rel (0) target = $region9
    $region8: #{tpu_custom_call.1} parent=1 // pred_region
      _
    $region9: #{tpu_custom_call.1} parent=1 // pred_fallthru
      _
    // Predicated region
    $region10: #{tpu_custom_call.1} parent=1 // pred_check
      _
    $region11: #{tpu_custom_call.1} parent=1 // pred_check_branch
      %37 = sbr.rel (0) target = $region13
    $region12: #{tpu_custom_call.1} parent=1 // pred_region
      _
    $region13: #{tpu_custom_call.1} parent=1 // pred_fallthru
      _
    // Predicated region
    $region14: #{tpu_custom_call.1} parent=1 // pred_check
      _
    $region15: #{tpu_custom_call.1} parent=1 // pred_check_branch
      %39 = sbr.rel (0) target = $region17
    $region16: #{tpu_custom_call.1} parent=1 // pred_region
      _
    $region17: #{tpu_custom_call.1} parent=1 // pred_fallthru
      _
    // Predicated region
    $region18: #{tpu_custom_call.1} parent=1 // pred_check
      _
    $region19: #{tpu_custom_call.1} parent=1 // pred_check_branch
      %41 = sbr.rel (0) target = $region21
    $region20: #{tpu_custom_call.1} parent=1 // pred_region
      _
    $region21: #{tpu_custom_call.1} parent=1 // pred_fallthru
      _
    // Predicated region
    $region22: #{tpu_custom_call.1} parent=1 // pred_check
      _
    $region23: #{tpu_custom_call.1} parent=1 // pred_check_branch
      %43 = sbr.rel (0) target = $region25
    $region24: #{tpu_custom_call.1} parent=1 // pred_region
      _
    $region25: #{tpu_custom_call.1} parent=1 // pred_fallthru
      _
    // Predicated region
    $region26: #{tpu_custom_call.1} parent=1 // pred_check
      _
    $region27: #{tpu_custom_call.1} parent=1 // pred_check_branch
      %45 = sbr.rel (0) target = $region29
    $region28: #{tpu_custom_call.1} parent=1 // pred_region
      _
    $region29: #{tpu_custom_call.1} parent=1 // pred_fallthru
      _
    // Predicated region
    $region30: #{tpu_custom_call.1} parent=1 // pred_check
      _
    $region31: #{tpu_custom_call.1} parent=1 // pred_check_branch
      %47 = sbr.rel (0) target = $region33
    $region32: #{tpu_custom_call.1} parent=1 // pred_region
      %s49 = ssub.s32 16, 16
      %50 = vsyncadd [#allocation7], %s49
      %s52 = sshll.u32 [#allocation6], 4
      %s53 = int_to_ptr.vmem [resolvable:$true] %s52
      %55 = dma.hbm_to_vmem [thread:$0]  %s7, 16, %s53, [#allocation7]
    $region33: #{tpu_custom_call.1} parent=1 // pred_fallthru
      _
    // Predicated region
    $region34: #{tpu_custom_call.1} parent=1 // pred_check
      _
    $region35: #{tpu_custom_call.1} parent=1 // pred_check_branch
      %57 = sbr.rel (0) target = $region37
    $region36: #{tpu_custom_call.1} parent=1 // pred_region
      _
    $region37: #{tpu_custom_call.1} parent=1 // pred_fallthru
      _
    // Predicated region
    $region38: #{tpu_custom_call.1} parent=1 // pred_check
      _
    $region39: #{tpu_custom_call.1} parent=1 // pred_check_branch
      %59 = sbr.rel (0) target = $region41
    $region40: #{tpu_custom_call.1} parent=1 // pred_region
      %s61 = ssub.s32 16, 16
      %62 = vsyncadd [#allocation7], %s61
      %s64 = sshll.u32 [#allocation8], 4
      %s65 = int_to_ptr.vmem [resolvable:$true] %s64
      %67 = dma.hbm_to_vmem [thread:$0]  %s9, 16, %s65, [#allocation7]
    $region41: #{tpu_custom_call.1} parent=1 // pred_fallthru
      _
    // Predicated region
    $region42: #{tpu_custom_call.1} parent=1 // pred_check
      _
    $region43: #{tpu_custom_call.1} parent=1 // pred_check_branch
      %69 = sbr.rel (0) target = $region45
    $region44: #{tpu_custom_call.1} parent=1 // pred_region
      _
    $region45: #{tpu_custom_call.1} parent=1 // pred_fallthru
      _
    // Predicated region
    $region46: #{tpu_custom_call.1} parent=1 // pred_check
      _
    $region47: #{tpu_custom_call.1} parent=1 // pred_check_branch
      %71 = sbr.rel (0) target = $region49
    $region48: #{tpu_custom_call.1} parent=1 // pred_region
      _
    $region49: #{tpu_custom_call.1} parent=1 // pred_fallthru
      _
    // Predicated region
    $region50: #{tpu_custom_call.1} parent=1 // pred_check
      _
    $region51: #{tpu_custom_call.1} parent=1 // pred_check_branch
      %73 = sbr.rel (0) target = $region53
    $region52: #{tpu_custom_call.1} parent=1 // pred_region
      _
    $region53: #{tpu_custom_call.1} parent=1 // pred_fallthru
      _
    // Predicated region
    $region54: #{tpu_custom_call.1} parent=1 // pred_check
      _
    $region55: #{tpu_custom_call.1} parent=1 // pred_check_branch
      %75 = sbr.rel (0) target = $region57
    $region56: #{tpu_custom_call.1} parent=1 // pred_region
      _
    $region57: #{tpu_custom_call.1} parent=1 // pred_fallthru
      _
    // Predicated region
    $region58: #{tpu_custom_call.1} parent=1 // pred_check
      _
    $region59: #{tpu_custom_call.1} parent=1 // pred_check_branch
      %77 = sbr.rel (0) target = $region61
    $region60: #{tpu_custom_call.1} parent=1 // pred_region
      %78 = dma.done [#allocation4], 256
    $region61: #{tpu_custom_call.1} parent=1 // pred_fallthru
      _
    // Predicated region
    $region62: #{tpu_custom_call.1} parent=1 // pred_check
      _
    $region63: #{tpu_custom_call.1} parent=1 // pred_check_branch
      %80 = sbr.rel (0) target = $region65
    $region64: #{tpu_custom_call.1} parent=1 // pred_region
      %81 = dma.done [#allocation7], 16
    $region65: #{tpu_custom_call.1} parent=1 // pred_fallthru
      _
    // Predicated region
    $region66: #{tpu_custom_call.1} parent=1 // pred_check
      _
    $region67: #{tpu_custom_call.1} parent=1 // pred_check_branch
      %83 = sbr.rel (0) target = $region69
    $region68: #{tpu_custom_call.1} parent=1 // pred_region
      %84 = dma.done [#allocation7], 16
    $region69: #{tpu_custom_call.1} parent=1 // pred_fallthru
      _
    %v85 = vld [vmem:[#allocation3] sm:$0xff]
    %v86 = vld [vmem:[#allocation3 + $0x8] sm:$0xff]
    %v87 = vld [vmem:[%s1] sm:$0x3]
    %v88 = vld [vmem:[%s2] sm:$0xff]
    %v89 = vld [vmem:[%s2 + $0x8] sm:$0xff]
    %v90 = vld [vmem:[%s2 + $0x10] sm:$0xff]
    %v91 = vld [vmem:[%s2 + $0x18] sm:$0xff]
    %v92 = vld [vmem:[%s3] sm:$0x1]
    %v94 = vlaneseq
    %v95 = vshrl.u32 %v94, 7
    %v96 = vsub.s32 0, %v95
    %v97 = vrot.slane %v92, %v96
    %vm99 = vcmask 261120
    %v101 = vsel %vm99, %v85, 0
    %v104 = vsel %vm99, %v86, 0
    %106 = vmatprep.subr.mxu0 0.0
    %107 = vmatpush1.msra.mxu0 %v88
    %108 = vmatprep.subr.mxu0 0.0
    %109 = vmatpush1.msra.mxu0 %v89
    %110 = vmatprep.subr.mxu0 0.0
    %111 = vmatpush1.msra.mxu0 %v90
    %112 = vmatprep.subr.mxu0 0.0
    %113 = vmatpush1.msra.mxu0 %v91
    %114 = vmatprep.subr.mxu0 0.0
    %115 = vmatpush1.msra.mxu0 0.0
    %116 = vmatprep.subr.mxu0 0.0
    %117 = vmatpush1.msra.mxu0 0.0
    %118 = vmatprep.subr.mxu0 0.0
    %119 = vmatpush1.msra.mxu0 0.0
    %120 = vmatprep.subr.mxu0 0.0
    %121 = vmatpush1.msra.mxu0 0.0
    %122 = vmatprep.subr.mxu0 0.0
    %123 = vmatpush1.msra.mxu0 0.0
    %124 = vmatprep.subr.mxu0 0.0
    %125 = vmatpush1.msra.mxu0 0.0
    %126 = vmatprep.subr.mxu0 0.0
    %127 = vmatpush1.msra.mxu0 0.0
    %128 = vmatprep.subr.mxu0 0.0
    %129 = vmatpush1.msra.mxu0 0.0
    %130 = vmatprep.subr.mxu0 0.0
    %131 = vmatpush1.msra.mxu0 0.0
    %132 = vmatprep.subr.mxu0 0.0
    %133 = vmatpush1.msra.mxu0 0.0
    %134 = vmatprep.subr.mxu0 0.0
    %135 = vmatpush1.msra.mxu0 0.0
    %136 = vmatprep.subr.mxu0 0.0
    %137 = vmatpush1.msra.mxu0 0.0
    %138 = vmatprep.subr.mxu0 0.0
    %139 = vmatpush1.msra.mxu0 0.0
    %140 = vmatprep.subr.mxu0 0.0
    %141 = vmatpush1.msra.mxu0 0.0
    %142 = vmatprep.subr.mxu0 0.0
    %143 = vmatpush1.msra.mxu0 0.0
    %144 = vmatprep.subr.mxu0 0.0
    %145 = vmatpush1.msra.mxu0 0.0
    %146 = vmatprep.subr.mxu0 0.0
    %147 = vmatpush1.msra.mxu0 0.0
    %148 = vmatprep.subr.mxu0 0.0
    %149 = vmatpush1.msra.mxu0 0.0
    %150 = vmatprep.subr.mxu0 0.0
    %151 = vmatpush1.msra.mxu0 0.0
    %152 = vmatprep.subr.mxu0 0.0
    %153 = vmatpush1.msra.mxu0 0.0
    %154 = vmatprep.subr.mxu0 0.0
    %155 = vmatpush1.msra.mxu0 0.0
    %156 = vmatprep.subr.mxu0 0.0
    %157 = vmatpush1.msra.mxu0 0.0
    %158 = vmatprep.subr.mxu0 0.0
    %159 = vmatpush1.msra.mxu0 0.0
    %160 = vmatprep.subr.mxu0 0.0
    %161 = vmatpush1.msra.mxu0 0.0
    %162 = vmatprep.subr.mxu0 0.0
    %163 = vmatpush1.msra.mxu0 0.0
    %164 = vmatprep.subr.mxu0 0.0
    %165 = vmatpush1.msra.mxu0 0.0
    %166 = vmatprep.subr.mxu0 0.0
    %167 = vmatpush1.msra.mxu0 0.0
    %168 = vmatprep.subr.mxu0 0.0
    %169 = vmatpush1.msra.mxu0 0.0
    %170 = vmatprep.mubr.f32.mxu0 0.0
    %171 = vmatmul.mubr.f32.gmra.mrb[0].mxu0 %v101
    %v172 = vpop.f32.mrb[0].mxu0
    %v173 = vadd.f32 %v97, %v172
    %v174 = vpop.f32.mrb[0].mxu0
    %175 = vmatprep.mubr.f32.mxu0 0.0
    %176 = vmatmul.mubr.f32.gmra.mrb[0].mxu0 %v104
    %v177 = vpop.f32.mrb[0].mxu0
    %v178 = vadd.f32 %v97, %v177
    %v179 = vpop.f32.mrb[0].mxu0
    %180 = vdwg.mxu0
    %v181 = vlaneseq
    %v182 = vshrl.u32 %v181, 7
    %v183 = vsub.s32 0, %v182
    %v184 = vrot.slane %v87, %v183
    %186 = vrot.lane.b32.xlu0 %v173, 96
    %v187 = vpop.permute.xlu0 %186
    %vm188 = vcmask 64512
    %v189 = vsel %vm188, %v173, 0
    %v191 = vsel %vm188, %v187, 0
    %193 = vmatprep.subr.mxu0 0.0
    %194 = vmatpush1.xpose.msra.mxu0 %v191
    %195 = vmatprep.subr.mxu0 0.0
    %196 = vmatpush1.xpose.msra.mxu0 0.0
    %197 = vmatprep.subr.mxu0 0.0
    %198 = vmatpush1.xpose.msra.mxu0 0.0
    %199 = vmatprep.subr.mxu0 0.0
    %200 = vmatpush1.xpose.msra.mxu0 0.0
    %201 = vmatprep.subr.mxu0 0.0
    %202 = vmatpush1.xpose.msra.mxu0 0.0
    %203 = vmatprep.subr.mxu0 0.0
    %204 = vmatpush1.xpose.msra.mxu0 0.0
    %205 = vmatprep.subr.mxu0 0.0
    %206 = vmatpush1.xpose.msra.mxu0 0.0
    %207 = vmatprep.subr.mxu0 0.0
    %208 = vmatpush1.xpose.msra.mxu0 0.0
    %209 = vmatprep.subr.mxu0 0.0
    %210 = vmatpush1.xpose.msra.mxu0 0.0
    %211 = vmatprep.subr.mxu0 0.0
    %212 = vmatpush1.xpose.msra.mxu0 0.0
    %213 = vmatprep.subr.mxu0 0.0
    %214 = vmatpush1.xpose.msra.mxu0 0.0
    %215 = vmatprep.subr.mxu0 0.0
    %216 = vmatpush1.xpose.msra.mxu0 0.0
    %217 = vmatprep.subr.mxu0 0.0
    %218 = vmatpush1.xpose.msra.mxu0 0.0
    %219 = vmatprep.subr.mxu0 0.0
    %220 = vmatpush1.xpose.msra.mxu0 0.0
    %221 = vmatprep.subr.mxu0 0.0
    %222 = vmatpush1.xpose.msra.mxu0 0.0
    %223 = vmatprep.subr.mxu0 0.0
    %224 = vmatpush1.xpose.msra.mxu0 0.0
    %225 = vmatprep.subr.mxu0 0.0
    %226 = vmatpush1.xpose.msra.mxu0 0.0
    %227 = vmatprep.subr.mxu0 0.0
    %228 = vmatpush1.xpose.msra.mxu0 0.0
    %229 = vmatprep.subr.mxu0 0.0
    %230 = vmatpush1.xpose.msra.mxu0 0.0
    %231 = vmatprep.subr.mxu0 0.0
    %232 = vmatpush1.xpose.msra.mxu0 0.0
    %233 = vmatprep.subr.mxu0 0.0
    %234 = vmatpush1.xpose.msra.mxu0 0.0
    %235 = vmatprep.subr.mxu0 0.0
    %236 = vmatpush1.xpose.msra.mxu0 0.0
    %237 = vmatprep.subr.mxu0 0.0
    %238 = vmatpush1.xpose.msra.mxu0 0.0
    %239 = vmatprep.subr.mxu0 0.0
    %240 = vmatpush1.xpose.msra.mxu0 0.0
    %241 = vmatprep.subr.mxu0 0.0
    %242 = vmatpush1.xpose.msra.mxu0 0.0
    %243 = vmatprep.subr.mxu0 0.0
    %244 = vmatpush1.xpose.msra.mxu0 0.0
    %245 = vmatprep.subr.mxu0 0.0
    %246 = vmatpush1.xpose.msra.mxu0 0.0
    %247 = vmatprep.subr.mxu0 0.0
    %248 = vmatpush1.xpose.msra.mxu0 0.0
    %249 = vmatprep.subr.mxu0 0.0
    %250 = vmatpush1.xpose.msra.mxu0 0.0
    %251 = vmatprep.subr.mxu0 0.0
    %252 = vmatpush1.xpose.msra.mxu0 0.0
    %253 = vmatprep.subr.mxu0 0.0
    %254 = vmatpush1.xpose.msra.mxu0 0.0
    %255 = vmatprep.subr.mxu0 0.0
    %256 = vmatpush1.xpose.msra.mxu0 0.0
    %257 = vmatprep.mubr.f32.mxu0 0.0
    %258 = vmatmul.mubr.f32.gmra.mrb[0].mxu0 %v189
    %v259 = vpop.f32.mrb[0].mxu0
    %v260 = vadd.f32 0.0, %v259
    %v261 = vpop.f32.mrb[0].mxu0
    %262 = vdwg.mxu0
    %v263 = vmul.f32 %v260, 0.35355338
    %v264 = vadd.f32 %v263, %v184
    %v265 = vsel %vm188, %v264, -inf
    %266 = vmax.xlane.f32.xlu0 %v265
    %v267 = vpop.xlane.xlu0 %266
    %v268 = vsub.f32 %v264, %v267
    %v269 = vmul.f32 %v268, 1.442695
    %v270 = vpow.pop %v269
    %v271 = vsel %vm188, %v270, 0.0
    %272 = vadd.xlane.f32.xlu0 %v271
    %v273 = vpop.xlane.xlu0 %272
    %v274 = vrcp.pop %v273
    %v275 = vmul.f32 %v270, %v274
    %276 = vrot.lane.b32.xlu0 %v173, 64
    %v277 = vpop.permute.xlu0 %276
    %v280 = vsel %vm188, %v275, 0
    %282 = vmatprep.subr.mxu0 0.0
    %283 = vmatpush1.msra.mxu0 %v277
    %284 = vmatprep.subr.mxu0 0.0
    %285 = vmatpush1.msra.mxu0 0.0
    %286 = vmatprep.subr.mxu0 0.0
    %287 = vmatpush1.msra.mxu0 0.0
    %288 = vmatprep.subr.mxu0 0.0
    %289 = vmatpush1.msra.mxu0 0.0
    %290 = vmatprep.subr.mxu0 0.0
    %291 = vmatpush1.msra.mxu0 0.0
    %292 = vmatprep.subr.mxu0 0.0
    %293 = vmatpush1.msra.mxu0 0.0
    %294 = vmatprep.subr.mxu0 0.0
    %295 = vmatpush1.msra.mxu0 0.0
    %296 = vmatprep.subr.mxu0 0.0
    %297 = vmatpush1.msra.mxu0 0.0
    %298 = vmatprep.subr.mxu0 0.0
    %299 = vmatpush1.msra.mxu0 0.0
    %300 = vmatprep.subr.mxu0 0.0
    %301 = vmatpush1.msra.mxu0 0.0
    %302 = vmatprep.subr.mxu0 0.0
    %303 = vmatpush1.msra.mxu0 0.0
    %304 = vmatprep.subr.mxu0 0.0
    %305 = vmatpush1.msra.mxu0 0.0
    %306 = vmatprep.subr.mxu0 0.0
    %307 = vmatpush1.msra.mxu0 0.0
    %308 = vmatprep.subr.mxu0 0.0
    %309 = vmatpush1.msra.mxu0 0.0
    %310 = vmatprep.subr.mxu0 0.0
    %311 = vmatpush1.msra.mxu0 0.0
    %312 = vmatprep.subr.mxu0 0.0
    %313 = vmatpush1.msra.mxu0 0.0
    %314 = vmatprep.subr.mxu0 0.0
    %315 = vmatpush1.msra.mxu0 0.0
    %316 = vmatprep.subr.mxu0 0.0
    %317 = vmatpush1.msra.mxu0 0.0
    %318 = vmatprep.subr.mxu0 0.0
    %319 = vmatpush1.msra.mxu0 0.0
    %320 = vmatprep.subr.mxu0 0.0
    %321 = vmatpush1.msra.mxu0 0.0
    %322 = vmatprep.subr.mxu0 0.0
    %323 = vmatpush1.msra.mxu0 0.0
    %324 = vmatprep.subr.mxu0 0.0
    %325 = vmatpush1.msra.mxu0 0.0
    %326 = vmatprep.subr.mxu0 0.0
    %327 = vmatpush1.msra.mxu0 0.0
    %328 = vmatprep.subr.mxu0 0.0
    %329 = vmatpush1.msra.mxu0 0.0
    %330 = vmatprep.subr.mxu0 0.0
    %331 = vmatpush1.msra.mxu0 0.0
    %332 = vmatprep.subr.mxu0 0.0
    %333 = vmatpush1.msra.mxu0 0.0
    %334 = vmatprep.subr.mxu0 0.0
    %335 = vmatpush1.msra.mxu0 0.0
    %336 = vmatprep.subr.mxu0 0.0
    %337 = vmatpush1.msra.mxu0 0.0
    %338 = vmatprep.subr.mxu0 0.0
    %339 = vmatpush1.msra.mxu0 0.0
    %340 = vmatprep.subr.mxu0 0.0
    %341 = vmatpush1.msra.mxu0 0.0
    %342 = vmatprep.subr.mxu0 0.0
    %343 = vmatpush1.msra.mxu0 0.0
    %344 = vmatprep.subr.mxu0 0.0
    %345 = vmatpush1.msra.mxu0 0.0
    %346 = vmatprep.mubr.f32.mxu0 0.0
    %347 = vmatmul.mubr.f32.gmra.mrb[0].mxu0 %v280
    %v348 = vpop.f32.mrb[0].mxu0
    %v349 = vadd.f32 0.0, %v348
    %v350 = vpop.f32.mrb[0].mxu0
    %351 = vdwg.mxu0
    %352 = vst.msk [vmem:[#allocation2] sm:$0xff] %vm188, %v349
    %353 = vrot.lane.b32.xlu0 %v173, 120
    %v354 = vpop.permute.xlu0 %353
    %355 = vrot.lane.b32.xlu0 %v173, 88
    %v356 = vpop.permute.xlu0 %355
    %v357 = vsel %vm188, %v354, 0
    %v359 = vsel %vm188, %v356, 0
    %361 = vmatprep.subr.mxu0 0.0
    %362 = vmatpush1.xpose.msra.mxu0 %v359
    %363 = vmatprep.subr.mxu0 0.0
    %364 = vmatpush1.xpose.msra.mxu0 0.0
    %365 = vmatprep.subr.mxu0 0.0
    %366 = vmatpush1.xpose.msra.mxu0 0.0
    %367 = vmatprep.subr.mxu0 0.0
    %368 = vmatpush1.xpose.msra.mxu0 0.0
    %369 = vmatprep.subr.mxu0 0.0
    %370 = vmatpush1.xpose.msra.mxu0 0.0
    %371 = vmatprep.subr.mxu0 0.0
    %372 = vmatpush1.xpose.msra.mxu0 0.0
    %373 = vmatprep.subr.mxu0 0.0
    %374 = vmatpush1.xpose.msra.mxu0 0.0
    %375 = vmatprep.subr.mxu0 0.0
    %376 = vmatpush1.xpose.msra.mxu0 0.0
    %377 = vmatprep.subr.mxu0 0.0
    %378 = vmatpush1.xpose.msra.mxu0 0.0
    %379 = vmatprep.subr.mxu0 0.0
    %380 = vmatpush1.xpose.msra.mxu0 0.0
    %381 = vmatprep.subr.mxu0 0.0
    %382 = vmatpush1.xpose.msra.mxu0 0.0
    %383 = vmatprep.subr.mxu0 0.0
    %384 = vmatpush1.xpose.msra.mxu0 0.0
    %385 = vmatprep.subr.mxu0 0.0
    %386 = vmatpush1.xpose.msra.mxu0 0.0
    %387 = vmatprep.subr.mxu0 0.0
    %388 = vmatpush1.xpose.msra.mxu0 0.0
    %389 = vmatprep.subr.mxu0 0.0
    %390 = vmatpush1.xpose.msra.mxu0 0.0
    %391 = vmatprep.subr.mxu0 0.0
    %392 = vmatpush1.xpose.msra.mxu0 0.0
    %393 = vmatprep.subr.mxu0 0.0
    %394 = vmatpush1.xpose.msra.mxu0 0.0
    %395 = vmatprep.subr.mxu0 0.0
    %396 = vmatpush1.xpose.msra.mxu0 0.0
    %397 = vmatprep.subr.mxu0 0.0
    %398 = vmatpush1.xpose.msra.mxu0 0.0
    %399 = vmatprep.subr.mxu0 0.0
    %400 = vmatpush1.xpose.msra.mxu0 0.0
    %401 = vmatprep.subr.mxu0 0.0
    %402 = vmatpush1.xpose.msra.mxu0 0.0
    %403 = vmatprep.subr.mxu0 0.0
    %404 = vmatpush1.xpose.msra.mxu0 0.0
    %405 = vmatprep.subr.mxu0 0.0
    %406 = vmatpush1.xpose.msra.mxu0 0.0
    %407 = vmatprep.subr.mxu0 0.0
    %408 = vmatpush1.xpose.msra.mxu0 0.0
    %409 = vmatprep.subr.mxu0 0.0
    %410 = vmatpush1.xpose.msra.mxu0 0.0
    %411 = vmatprep.subr.mxu0 0.0
    %412 = vmatpush1.xpose.msra.mxu0 0.0
    %413 = vmatprep.subr.mxu0 0.0
    %414 = vmatpush1.xpose.msra.mxu0 0.0
    %415 = vmatprep.subr.mxu0 0.0
    %416 = vmatpush1.xpose.msra.mxu0 0.0
    %417 = vmatprep.subr.mxu0 0.0
    %418 = vmatpush1.xpose.msra.mxu0 0.0
    %419 = vmatprep.subr.mxu0 0.0
    %420 = vmatpush1.xpose.msra.mxu0 0.0
    %421 = vmatprep.subr.mxu0 0.0
    %422 = vmatpush1.xpose.msra.mxu0 0.0
    %423 = vmatprep.subr.mxu0 0.0
    %424 = vmatpush1.xpose.msra.mxu0 0.0
    %425 = vmatprep.mubr.f32.mxu0 0.0
    %426 = vmatmul.mubr.f32.gmra.mrb[0].mxu0 %v357
    %v427 = vpop.f32.mrb[0].mxu0
    %v428 = vadd.f32 0.0, %v427
    %v429 = vpop.f32.mrb[0].mxu0
    %430 = vdwg.mxu0
    %v431 = vmul.f32 %v428, 0.35355338
    %v432 = vadd.f32 %v431, %v184
    %v433 = vsel %vm188, %v432, -inf
    %434 = vmax.xlane.f32.xlu0 %v433
    %v435 = vpop.xlane.xlu0 %434
    %v436 = vsub.f32 %v432, %v435
    %v437 = vmul.f32 %v436, 1.442695
    %v438 = vpow.pop %v437
    %v439 = vsel %vm188, %v438, 0.0
    %440 = vadd.xlane.f32.xlu0 %v439
    %v441 = vpop.xlane.xlu0 %440
    %v442 = vrcp.pop %v441
    %v443 = vmul.f32 %v438, %v442
    %444 = vrot.lane.b32.xlu0 %v173, 56
    %v445 = vpop.permute.xlu0 %444
    %v448 = vsel %vm188, %v443, 0
    %450 = vmatprep.subr.mxu0 0.0
    %451 = vmatpush1.msra.mxu0 %v445
    %452 = vmatprep.subr.mxu0 0.0
    %453 = vmatpush1.msra.mxu0 0.0
    %454 = vmatprep.subr.mxu0 0.0
    %455 = vmatpush1.msra.mxu0 0.0
    %456 = vmatprep.subr.mxu0 0.0
    %457 = vmatpush1.msra.mxu0 0.0
    %458 = vmatprep.subr.mxu0 0.0
    %459 = vmatpush1.msra.mxu0 0.0
    %460 = vmatprep.subr.mxu0 0.0
    %461 = vmatpush1.msra.mxu0 0.0
    %462 = vmatprep.subr.mxu0 0.0
    %463 = vmatpush1.msra.mxu0 0.0
    %464 = vmatprep.subr.mxu0 0.0
    %465 = vmatpush1.msra.mxu0 0.0
    %466 = vmatprep.subr.mxu0 0.0
    %467 = vmatpush1.msra.mxu0 0.0
    %468 = vmatprep.subr.mxu0 0.0
    %469 = vmatpush1.msra.mxu0 0.0
    %470 = vmatprep.subr.mxu0 0.0
    %471 = vmatpush1.msra.mxu0 0.0
    %472 = vmatprep.subr.mxu0 0.0
    %473 = vmatpush1.msra.mxu0 0.0
    %474 = vmatprep.subr.mxu0 0.0
    %475 = vmatpush1.msra.mxu0 0.0
    %476 = vmatprep.subr.mxu0 0.0
    %477 = vmatpush1.msra.mxu0 0.0
    %478 = vmatprep.subr.mxu0 0.0
    %479 = vmatpush1.msra.mxu0 0.0
    %480 = vmatprep.subr.mxu0 0.0
    %481 = vmatpush1.msra.mxu0 0.0
    %482 = vmatprep.subr.mxu0 0.0
    %483 = vmatpush1.msra.mxu0 0.0
    %484 = vmatprep.subr.mxu0 0.0
    %485 = vmatpush1.msra.mxu0 0.0
    %486 = vmatprep.subr.mxu0 0.0
    %487 = vmatpush1.msra.mxu0 0.0
    %488 = vmatprep.subr.mxu0 0.0
    %489 = vmatpush1.msra.mxu0 0.0
    %490 = vmatprep.subr.mxu0 0.0
    %491 = vmatpush1.msra.mxu0 0.0
    %492 = vmatprep.subr.mxu0 0.0
    %493 = vmatpush1.msra.mxu0 0.0
    %494 = vmatprep.subr.mxu0 0.0
    %495 = vmatpush1.msra.mxu0 0.0
    %496 = vmatprep.subr.mxu0 0.0
    %497 = vmatpush1.msra.mxu0 0.0
    %498 = vmatprep.subr.mxu0 0.0
    %499 = vmatpush1.msra.mxu0 0.0
    %500 = vmatprep.subr.mxu0 0.0
    %501 = vmatpush1.msra.mxu0 0.0
    %502 = vmatprep.subr.mxu0 0.0
    %503 = vmatpush1.msra.mxu0 0.0
    %504 = vmatprep.subr.mxu0 0.0
    %505 = vmatpush1.msra.mxu0 0.0
    %506 = vmatprep.subr.mxu0 0.0
    %507 = vmatpush1.msra.mxu0 0.0
    %508 = vmatprep.subr.mxu0 0.0
    %509 = vmatpush1.msra.mxu0 0.0
    %510 = vmatprep.subr.mxu0 0.0
    %511 = vmatpush1.msra.mxu0 0.0
    %512 = vmatprep.subr.mxu0 0.0
    %513 = vmatpush1.msra.mxu0 0.0
    %514 = vmatprep.mubr.f32.mxu0 0.0
    %515 = vmatmul.mubr.f32.gmra.mrb[0].mxu0 %v448
    %v516 = vpop.f32.mrb[0].mxu0
    %v517 = vadd.f32 0.0, %v516
    %v518 = vpop.f32.mrb[0].mxu0
    %519 = vdwg.mxu0
    %521 = vrot.lane.b32.xlu0 %v517, 8
    %v522 = vpop.permute.xlu0 %521
    %vm524 = vcmask 130112
    %525 = vst.msk [vmem:[#allocation2] sm:$0xff] %vm524, %v522
    %526 = vrot.lane.b32.xlu0 %v173, 112
    %v527 = vpop.permute.xlu0 %526
    %528 = vrot.lane.b32.xlu0 %v173, 80
    %v529 = vpop.permute.xlu0 %528
    %v530 = vsel %vm188, %v527, 0
    %v532 = vsel %vm188, %v529, 0
    %534 = vmatprep.subr.mxu0 0.0
    %535 = vmatpush1.xpose.msra.mxu0 %v532
    %536 = vmatprep.subr.mxu0 0.0
    %537 = vmatpush1.xpose.msra.mxu0 0.0
    %538 = vmatprep.subr.mxu0 0.0
    %539 = vmatpush1.xpose.msra.mxu0 0.0
    %540 = vmatprep.subr.mxu0 0.0
    %541 = vmatpush1.xpose.msra.mxu0 0.0
    %542 = vmatprep.subr.mxu0 0.0
    %543 = vmatpush1.xpose.msra.mxu0 0.0
    %544 = vmatprep.subr.mxu0 0.0
    %545 = vmatpush1.xpose.msra.mxu0 0.0
    %546 = vmatprep.subr.mxu0 0.0
    %547 = vmatpush1.xpose.msra.mxu0 0.0
    %548 = vmatprep.subr.mxu0 0.0
    %549 = vmatpush1.xpose.msra.mxu0 0.0
    %550 = vmatprep.subr.mxu0 0.0
    %551 = vmatpush1.xpose.msra.mxu0 0.0
    %552 = vmatprep.subr.mxu0 0.0
    %553 = vmatpush1.xpose.msra.mxu0 0.0
    %554 = vmatprep.subr.mxu0 0.0
    %555 = vmatpush1.xpose.msra.mxu0 0.0
    %556 = vmatprep.subr.mxu0 0.0
    %557 = vmatpush1.xpose.msra.mxu0 0.0
    %558 = vmatprep.subr.mxu0 0.0
    %559 = vmatpush1.xpose.msra.mxu0 0.0
    %560 = vmatprep.subr.mxu0 0.0
    %561 = vmatpush1.xpose.msra.mxu0 0.0
    %562 = vmatprep.subr.mxu0 0.0
    %563 = vmatpush1.xpose.msra.mxu0 0.0
    %564 = vmatprep.subr.mxu0 0.0
    %565 = vmatpush1.xpose.msra.mxu0 0.0
    %566 = vmatprep.subr.mxu0 0.0
    %567 = vmatpush1.xpose.msra.mxu0 0.0
    %568 = vmatprep.subr.mxu0 0.0
    %569 = vmatpush1.xpose.msra.mxu0 0.0
    %570 = vmatprep.subr.mxu0 0.0
    %571 = vmatpush1.xpose.msra.mxu0 0.0
    %572 = vmatprep.subr.mxu0 0.0
    %573 = vmatpush1.xpose.msra.mxu0 0.0
    %574 = vmatprep.subr.mxu0 0.0
    %575 = vmatpush1.xpose.msra.mxu0 0.0
    %576 = vmatprep.subr.mxu0 0.0
    %577 = vmatpush1.xpose.msra.mxu0 0.0
    %578 = vmatprep.subr.mxu0 0.0
    %579 = vmatpush1.xpose.msra.mxu0 0.0
    %580 = vmatprep.subr.mxu0 0.0
    %581 = vmatpush1.xpose.msra.mxu0 0.0
    %582 = vmatprep.subr.mxu0 0.0
    %583 = vmatpush1.xpose.msra.mxu0 0.0
    %584 = vmatprep.subr.mxu0 0.0
    %585 = vmatpush1.xpose.msra.mxu0 0.0
    %586 = vmatprep.subr.mxu0 0.0
    %587 = vmatpush1.xpose.msra.mxu0 0.0
    %588 = vmatprep.subr.mxu0 0.0
    %589 = vmatpush1.xpose.msra.mxu0 0.0
    %590 = vmatprep.subr.mxu0 0.0
    %591 = vmatpush1.xpose.msra.mxu0 0.0
    %592 = vmatprep.subr.mxu0 0.0
    %593 = vmatpush1.xpose.msra.mxu0 0.0
    %594 = vmatprep.subr.mxu0 0.0
    %595 = vmatpush1.xpose.msra.mxu0 0.0
    %596 = vmatprep.subr.mxu0 0.0
    %597 = vmatpush1.xpose.msra.mxu0 0.0
    %598 = vmatprep.mubr.f32.mxu0 0.0
    %599 = vmatmul.mubr.f32.gmra.mrb[0].mxu0 %v530
    %v600 = vpop.f32.mrb[0].mxu0
    %v601 = vadd.f32 0.0, %v600
    %v602 = vpop.f32.mrb[0].mxu0
    %603 = vdwg.mxu0
    %v604 = vmul.f32 %v601, 0.35355338
    %v605 = vadd.f32 %v604, %v184
    %v606 = vsel %vm188, %v605, -inf
    %607 = vmax.xlane.f32.xlu0 %v606
    %v608 = vpop.xlane.xlu0 %607
    %v609 = vsub.f32 %v605, %v608
    %v610 = vmul.f32 %v609, 1.442695
    %v611 = vpow.pop %v610
    %v612 = vsel %vm188, %v611, 0.0
    %613 = vadd.xlane.f32.xlu0 %v612
    %v614 = vpop.xlane.xlu0 %613
    %v615 = vrcp.pop %v614
    %v616 = vmul.f32 %v611, %v615
    %617 = vrot.lane.b32.xlu0 %v173, 48
    %v618 = vpop.permute.xlu0 %617
    %v621 = vsel %vm188, %v616, 0
    %623 = vmatprep.subr.mxu0 0.0
    %624 = vmatpush1.msra.mxu0 %v618
    %625 = vmatprep.subr.mxu0 0.0
    %626 = vmatpush1.msra.mxu0 0.0
    %627 = vmatprep.subr.mxu0 0.0
    %628 = vmatpush1.msra.mxu0 0.0
    %629 = vmatprep.subr.mxu0 0.0
    %630 = vmatpush1.msra.mxu0 0.0
    %631 = vmatprep.subr.mxu0 0.0
    %632 = vmatpush1.msra.mxu0 0.0
    %633 = vmatprep.subr.mxu0 0.0
    %634 = vmatpush1.msra.mxu0 0.0
    %635 = vmatprep.subr.mxu0 0.0
    %636 = vmatpush1.msra.mxu0 0.0
    %637 = vmatprep.subr.mxu0 0.0
    %638 = vmatpush1.msra.mxu0 0.0
    %639 = vmatprep.subr.mxu0 0.0
    %640 = vmatpush1.msra.mxu0 0.0
    %641 = vmatprep.subr.mxu0 0.0
    %642 = vmatpush1.msra.mxu0 0.0
    %643 = vmatprep.subr.mxu0 0.0
    %644 = vmatpush1.msra.mxu0 0.0
    %645 = vmatprep.subr.mxu0 0.0
    %646 = vmatpush1.msra.mxu0 0.0
    %647 = vmatprep.subr.mxu0 0.0
    %648 = vmatpush1.msra.mxu0 0.0
    %649 = vmatprep.subr.mxu0 0.0
    %650 = vmatpush1.msra.mxu0 0.0
    %651 = vmatprep.subr.mxu0 0.0
    %652 = vmatpush1.msra.mxu0 0.0
    %653 = vmatprep.subr.mxu0 0.0
    %654 = vmatpush1.msra.mxu0 0.0
    %655 = vmatprep.subr.mxu0 0.0
    %656 = vmatpush1.msra.mxu0 0.0
    %657 = vmatprep.subr.mxu0 0.0
    %658 = vmatpush1.msra.mxu0 0.0
    %659 = vmatprep.subr.mxu0 0.0
    %660 = vmatpush1.msra.mxu0 0.0
    %661 = vmatprep.subr.mxu0 0.0
    %662 = vmatpush1.msra.mxu0 0.0
    %663 = vmatprep.subr.mxu0 0.0
    %664 = vmatpush1.msra.mxu0 0.0
    %665 = vmatprep.subr.mxu0 0.0
    %666 = vmatpush1.msra.mxu0 0.0
    %667 = vmatprep.subr.mxu0 0.0
    %668 = vmatpush1.msra.mxu0 0.0
    %669 = vmatprep.subr.mxu0 0.0
    %670 = vmatpush1.msra.mxu0 0.0
    %671 = vmatprep.subr.mxu0 0.0
    %672 = vmatpush1.msra.mxu0 0.0
    %673 = vmatprep.subr.mxu0 0.0
    %674 = vmatpush1.msra.mxu0 0.0
    %675 = vmatprep.subr.mxu0 0.0
    %676 = vmatpush1.msra.mxu0 0.0
    %677 = vmatprep.subr.mxu0 0.0
    %678 = vmatpush1.msra.mxu0 0.0
    %679 = vmatprep.subr.mxu0 0.0
    %680 = vmatpush1.msra.mxu0 0.0
    %681 = vmatprep.subr.mxu0 0.0
    %682 = vmatpush1.msra.mxu0 0.0
    %683 = vmatprep.subr.mxu0 0.0
    %684 = vmatpush1.msra.mxu0 0.0
    %685 = vmatprep.subr.mxu0 0.0
    %686 = vmatpush1.msra.mxu0 0.0
    %687 = vmatprep.mubr.f32.mxu0 0.0
    %688 = vmatmul.mubr.f32.gmra.mrb[0].mxu0 %v621
    %v689 = vpop.f32.mrb[0].mxu0
    %v690 = vadd.f32 0.0, %v689
    %v691 = vpop.f32.mrb[0].mxu0
    %692 = vdwg.mxu0
    %694 = vrot.lane.b32.xlu0 %v690, 16
    %v695 = vpop.permute.xlu0 %694
    %vm697 = vcmask 195712
    %698 = vst.msk [vmem:[#allocation2] sm:$0xff] %vm697, %v695
    %699 = vrot.lane.b32.xlu0 %v173, 104
    %v700 = vpop.permute.xlu0 %699
    %701 = vrot.lane.b32.xlu0 %v173, 72
    %v702 = vpop.permute.xlu0 %701
    %v703 = vsel %vm188, %v700, 0
    %v705 = vsel %vm188, %v702, 0
    %707 = vmatprep.subr.mxu0 0.0
    %708 = vmatpush1.xpose.msra.mxu0 %v705
    %709 = vmatprep.subr.mxu0 0.0
    %710 = vmatpush1.xpose.msra.mxu0 0.0
    %711 = vmatprep.subr.mxu0 0.0
    %712 = vmatpush1.xpose.msra.mxu0 0.0
    %713 = vmatprep.subr.mxu0 0.0
    %714 = vmatpush1.xpose.msra.mxu0 0.0
    %715 = vmatprep.subr.mxu0 0.0
    %716 = vmatpush1.xpose.msra.mxu0 0.0
    %717 = vmatprep.subr.mxu0 0.0
    %718 = vmatpush1.xpose.msra.mxu0 0.0
    %719 = vmatprep.subr.mxu0 0.0
    %720 = vmatpush1.xpose.msra.mxu0 0.0
    %721 = vmatprep.subr.mxu0 0.0
    %722 = vmatpush1.xpose.msra.mxu0 0.0
    %723 = vmatprep.subr.mxu0 0.0
    %724 = vmatpush1.xpose.msra.mxu0 0.0
    %725 = vmatprep.subr.mxu0 0.0
    %726 = vmatpush1.xpose.msra.mxu0 0.0
    %727 = vmatprep.subr.mxu0 0.0
    %728 = vmatpush1.xpose.msra.mxu0 0.0
    %729 = vmatprep.subr.mxu0 0.0
    %730 = vmatpush1.xpose.msra.mxu0 0.0
    %731 = vmatprep.subr.mxu0 0.0
    %732 = vmatpush1.xpose.msra.mxu0 0.0
    %733 = vmatprep.subr.mxu0 0.0
    %734 = vmatpush1.xpose.msra.mxu0 0.0
    %735 = vmatprep.subr.mxu0 0.0
    %736 = vmatpush1.xpose.msra.mxu0 0.0
    %737 = vmatprep.subr.mxu0 0.0
    %738 = vmatpush1.xpose.msra.mxu0 0.0
    %739 = vmatprep.subr.mxu0 0.0
    %740 = vmatpush1.xpose.msra.mxu0 0.0
    %741 = vmatprep.subr.mxu0 0.0
    %742 = vmatpush1.xpose.msra.mxu0 0.0
    %743 = vmatprep.subr.mxu0 0.0
    %744 = vmatpush1.xpose.msra.mxu0 0.0
    %745 = vmatprep.subr.mxu0 0.0
    %746 = vmatpush1.xpose.msra.mxu0 0.0
    %747 = vmatprep.subr.mxu0 0.0
    %748 = vmatpush1.xpose.msra.mxu0 0.0
    %749 = vmatprep.subr.mxu0 0.0
    %750 = vmatpush1.xpose.msra.mxu0 0.0
    %751 = vmatprep.subr.mxu0 0.0
    %752 = vmatpush1.xpose.msra.mxu0 0.0
    %753 = vmatprep.subr.mxu0 0.0
    %754 = vmatpush1.xpose.msra.mxu0 0.0
    %755 = vmatprep.subr.mxu0 0.0
    %756 = vmatpush1.xpose.msra.mxu0 0.0
    %757 = vmatprep.subr.mxu0 0.0
    %758 = vmatpush1.xpose.msra.mxu0 0.0
    %759 = vmatprep.subr.mxu0 0.0
    %760 = vmatpush1.xpose.msra.mxu0 0.0
    %761 = vmatprep.subr.mxu0 0.0
    %762 = vmatpush1.xpose.msra.mxu0 0.0
    %763 = vmatprep.subr.mxu0 0.0
    %764 = vmatpush1.xpose.msra.mxu0 0.0
    %765 = vmatprep.subr.mxu0 0.0
    %766 = vmatpush1.xpose.msra.mxu0 0.0
    %767 = vmatprep.subr.mxu0 0.0
    %768 = vmatpush1.xpose.msra.mxu0 0.0
    %769 = vmatprep.subr.mxu0 0.0
    %770 = vmatpush1.xpose.msra.mxu0 0.0
    %771 = vmatprep.mubr.f32.mxu0 0.0
    %772 = vmatmul.mubr.f32.gmra.mrb[0].mxu0 %v703
    %v773 = vpop.f32.mrb[0].mxu0
    %v774 = vadd.f32 0.0, %v773
    %v775 = vpop.f32.mrb[0].mxu0
    %776 = vdwg.mxu0
    %v777 = vmul.f32 %v774, 0.35355338
    %v778 = vadd.f32 %v777, %v184
    %v779 = vsel %vm188, %v778, -inf
    %780 = vmax.xlane.f32.xlu0 %v779
    %v781 = vpop.xlane.xlu0 %780
    %v782 = vsub.f32 %v778, %v781
    %v783 = vmul.f32 %v782, 1.442695
    %v784 = vpow.pop %v783
    %v785 = vsel %vm188, %v784, 0.0
    %786 = vadd.xlane.f32.xlu0 %v785
    %v787 = vpop.xlane.xlu0 %786
    %v788 = vrcp.pop %v787
    %v789 = vmul.f32 %v784, %v788
    %790 = vrot.lane.b32.xlu0 %v173, 40
    %v791 = vpop.permute.xlu0 %790
    %v794 = vsel %vm188, %v789, 0
    %796 = vmatprep.subr.mxu0 0.0
    %797 = vmatpush1.msra.mxu0 %v791
    %798 = vmatprep.subr.mxu0 0.0
    %799 = vmatpush1.msra.mxu0 0.0
    %800 = vmatprep.subr.mxu0 0.0
    %801 = vmatpush1.msra.mxu0 0.0
    %802 = vmatprep.subr.mxu0 0.0
    %803 = vmatpush1.msra.mxu0 0.0
    %804 = vmatprep.subr.mxu0 0.0
    %805 = vmatpush1.msra.mxu0 0.0
    %806 = vmatprep.subr.mxu0 0.0
    %807 = vmatpush1.msra.mxu0 0.0
    %808 = vmatprep.subr.mxu0 0.0
    %809 = vmatpush1.msra.mxu0 0.0
    %810 = vmatprep.subr.mxu0 0.0
    %811 = vmatpush1.msra.mxu0 0.0
    %812 = vmatprep.subr.mxu0 0.0
    %813 = vmatpush1.msra.mxu0 0.0
    %814 = vmatprep.subr.mxu0 0.0
    %815 = vmatpush1.msra.mxu0 0.0
    %816 = vmatprep.subr.mxu0 0.0
    %817 = vmatpush1.msra.mxu0 0.0
    %818 = vmatprep.subr.mxu0 0.0
    %819 = vmatpush1.msra.mxu0 0.0
    %820 = vmatprep.subr.mxu0 0.0
    %821 = vmatpush1.msra.mxu0 0.0
    %822 = vmatprep.subr.mxu0 0.0
    %823 = vmatpush1.msra.mxu0 0.0
    %824 = vmatprep.subr.mxu0 0.0
    %825 = vmatpush1.msra.mxu0 0.0
    %826 = vmatprep.subr.mxu0 0.0
    %827 = vmatpush1.msra.mxu0 0.0
    %828 = vmatprep.subr.mxu0 0.0
    %829 = vmatpush1.msra.mxu0 0.0
    %830 = vmatprep.subr.mxu0 0.0
    %831 = vmatpush1.msra.mxu0 0.0
    %832 = vmatprep.subr.mxu0 0.0
    %833 = vmatpush1.msra.mxu0 0.0
    %834 = vmatprep.subr.mxu0 0.0
    %835 = vmatpush1.msra.mxu0 0.0
    %836 = vmatprep.subr.mxu0 0.0
    %837 = vmatpush1.msra.mxu0 0.0
    %838 = vmatprep.subr.mxu0 0.0
    %839 = vmatpush1.msra.mxu0 0.0
    %840 = vmatprep.subr.mxu0 0.0
    %841 = vmatpush1.msra.mxu0 0.0
    %842 = vmatprep.subr.mxu0 0.0
    %843 = vmatpush1.msra.mxu0 0.0
    %844 = vmatprep.subr.mxu0 0.0
    %845 = vmatpush1.msra.mxu0 0.0
    %846 = vmatprep.subr.mxu0 0.0
    %847 = vmatpush1.msra.mxu0 0.0
    %848 = vmatprep.subr.mxu0 0.0
    %849 = vmatpush1.msra.mxu0 0.0
    %850 = vmatprep.subr.mxu0 0.0
    %851 = vmatpush1.msra.mxu0 0.0
    %852 = vmatprep.subr.mxu0 0.0
    %853 = vmatpush1.msra.mxu0 0.0
    %854 = vmatprep.subr.mxu0 0.0
    %855 = vmatpush1.msra.mxu0 0.0
    %856 = vmatprep.subr.mxu0 0.0
    %857 = vmatpush1.msra.mxu0 0.0
    %858 = vmatprep.subr.mxu0 0.0
    %859 = vmatpush1.msra.mxu0 0.0
    %860 = vmatprep.mubr.f32.mxu0 0.0
    %861 = vmatmul.mubr.f32.gmra.mrb[0].mxu0 %v794
    %v862 = vpop.f32.mrb[0].mxu0
    %v863 = vadd.f32 0.0, %v862
    %v864 = vpop.f32.mrb[0].mxu0
    %865 = vdwg.mxu0
    %867 = vrot.lane.b32.xlu0 %v863, 24
    %v868 = vpop.permute.xlu0 %867
    %vm870 = vcmask 261312
    %871 = vst.msk [vmem:[#allocation2] sm:$0xff] %vm870, %v868
    %v872 = vlaneseq
    %v873 = vshrl.u32 %v872, 7
    %v874 = vsub.s32 1, %v873
    %v875 = vrot.slane %v87, %v874
    %877 = vrot.lane.b32.xlu0 %v178, 96
    %v878 = vpop.permute.xlu0 %877
    %v879 = vsel %vm188, %v178, 0
    %v881 = vsel %vm188, %v878, 0
    %883 = vmatprep.subr.mxu0 0.0
    %884 = vmatpush1.xpose.msra.mxu0 %v881
    %885 = vmatprep.subr.mxu0 0.0
    %886 = vmatpush1.xpose.msra.mxu0 0.0
    %887 = vmatprep.subr.mxu0 0.0
    %888 = vmatpush1.xpose.msra.mxu0 0.0
    %889 = vmatprep.subr.mxu0 0.0
    %890 = vmatpush1.xpose.msra.mxu0 0.0
    %891 = vmatprep.subr.mxu0 0.0
    %892 = vmatpush1.xpose.msra.mxu0 0.0
    %893 = vmatprep.subr.mxu0 0.0
    %894 = vmatpush1.xpose.msra.mxu0 0.0
    %895 = vmatprep.subr.mxu0 0.0
    %896 = vmatpush1.xpose.msra.mxu0 0.0
    %897 = vmatprep.subr.mxu0 0.0
    %898 = vmatpush1.xpose.msra.mxu0 0.0
    %899 = vmatprep.subr.mxu0 0.0
    %900 = vmatpush1.xpose.msra.mxu0 0.0
    %901 = vmatprep.subr.mxu0 0.0
    %902 = vmatpush1.xpose.msra.mxu0 0.0
    %903 = vmatprep.subr.mxu0 0.0
    %904 = vmatpush1.xpose.msra.mxu0 0.0
    %905 = vmatprep.subr.mxu0 0.0
    %906 = vmatpush1.xpose.msra.mxu0 0.0
    %907 = vmatprep.subr.mxu0 0.0
    %908 = vmatpush1.xpose.msra.mxu0 0.0
    %909 = vmatprep.subr.mxu0 0.0
    %910 = vmatpush1.xpose.msra.mxu0 0.0
    %911 = vmatprep.subr.mxu0 0.0
    %912 = vmatpush1.xpose.msra.mxu0 0.0
    %913 = vmatprep.subr.mxu0 0.0
    %914 = vmatpush1.xpose.msra.mxu0 0.0
    %915 = vmatprep.subr.mxu0 0.0
    %916 = vmatpush1.xpose.msra.mxu0 0.0
    %917 = vmatprep.subr.mxu0 0.0
    %918 = vmatpush1.xpose.msra.mxu0 0.0
    %919 = vmatprep.subr.mxu0 0.0
    %920 = vmatpush1.xpose.msra.mxu0 0.0
    %921 = vmatprep.subr.mxu0 0.0
    %922 = vmatpush1.xpose.msra.mxu0 0.0
    %923 = vmatprep.subr.mxu0 0.0
    %924 = vmatpush1.xpose.msra.mxu0 0.0
    %925 = vmatprep.subr.mxu0 0.0
    %926 = vmatpush1.xpose.msra.mxu0 0.0
    %927 = vmatprep.subr.mxu0 0.0
    %928 = vmatpush1.xpose.msra.mxu0 0.0
    %929 = vmatprep.subr.mxu0 0.0
    %930 = vmatpush1.xpose.msra.mxu0 0.0
    %931 = vmatprep.subr.mxu0 0.0
    %932 = vmatpush1.xpose.msra.mxu0 0.0
    %933 = vmatprep.subr.mxu0 0.0
    %934 = vmatpush1.xpose.msra.mxu0 0.0
    %935 = vmatprep.subr.mxu0 0.0
    %936 = vmatpush1.xpose.msra.mxu0 0.0
    %937 = vmatprep.subr.mxu0 0.0
    %938 = vmatpush1.xpose.msra.mxu0 0.0
    %939 = vmatprep.subr.mxu0 0.0
    %940 = vmatpush1.xpose.msra.mxu0 0.0
    %941 = vmatprep.subr.mxu0 0.0
    %942 = vmatpush1.xpose.msra.mxu0 0.0
    %943 = vmatprep.subr.mxu0 0.0
    %944 = vmatpush1.xpose.msra.mxu0 0.0
    %945 = vmatprep.subr.mxu0 0.0
    %946 = vmatpush1.xpose.msra.mxu0 0.0
    %947 = vmatprep.mubr.f32.mxu0 0.0
    %948 = vmatmul.mubr.f32.gmra.mrb[0].mxu0 %v879
    %v949 = vpop.f32.mrb[0].mxu0
    %v950 = vadd.f32 0.0, %v949
    %v951 = vpop.f32.mrb[0].mxu0
    %952 = vdwg.mxu0
    %v953 = vmul.f32 %v950, 0.35355338
    %v954 = vadd.f32 %v953, %v875
    %v955 = vsel %vm188, %v954, -inf
    %956 = vmax.xlane.f32.xlu0 %v955
    %v957 = vpop.xlane.xlu0 %956
    %v958 = vsub.f32 %v954, %v957
    %v959 = vmul.f32 %v958, 1.442695
    %v960 = vpow.pop %v959
    %v961 = vsel %vm188, %v960, 0.0
    %962 = vadd.xlane.f32.xlu0 %v961
    %v963 = vpop.xlane.xlu0 %962
    %v964 = vrcp.pop %v963
    %v965 = vmul.f32 %v960, %v964
    %966 = vrot.lane.b32.xlu0 %v178, 64
    %v967 = vpop.permute.xlu0 %966
    %v970 = vsel %vm188, %v965, 0
    %972 = vmatprep.subr.mxu0 0.0
    %973 = vmatpush1.msra.mxu0 %v967
    %974 = vmatprep.subr.mxu0 0.0
    %975 = vmatpush1.msra.mxu0 0.0
    %976 = vmatprep.subr.mxu0 0.0
    %977 = vmatpush1.msra.mxu0 0.0
    %978 = vmatprep.subr.mxu0 0.0
    %979 = vmatpush1.msra.mxu0 0.0
    %980 = vmatprep.subr.mxu0 0.0
    %981 = vmatpush1.msra.mxu0 0.0
    %982 = vmatprep.subr.mxu0 0.0
    %983 = vmatpush1.msra.mxu0 0.0
    %984 = vmatprep.subr.mxu0 0.0
    %985 = vmatpush1.msra.mxu0 0.0
    %986 = vmatprep.subr.mxu0 0.0
    %987 = vmatpush1.msra.mxu0 0.0
    %988 = vmatprep.subr.mxu0 0.0
    %989 = vmatpush1.msra.mxu0 0.0
    %990 = vmatprep.subr.mxu0 0.0
    %991 = vmatpush1.msra.mxu0 0.0
    %992 = vmatprep.subr.mxu0 0.0
    %993 = vmatpush1.msra.mxu0 0.0
    %994 = vmatprep.subr.mxu0 0.0
    %995 = vmatpush1.msra.mxu0 0.0
    %996 = vmatprep.subr.mxu0 0.0
    %997 = vmatpush1.msra.mxu0 0.0
    %998 = vmatprep.subr.mxu0 0.0
    %999 = vmatpush1.msra.mxu0 0.0
    %1000 = vmatprep.subr.mxu0 0.0
    %1001 = vmatpush1.msra.mxu0 0.0
    %1002 = vmatprep.subr.mxu0 0.0
    %1003 = vmatpush1.msra.mxu0 0.0
    %1004 = vmatprep.subr.mxu0 0.0
    %1005 = vmatpush1.msra.mxu0 0.0
    %1006 = vmatprep.subr.mxu0 0.0
    %1007 = vmatpush1.msra.mxu0 0.0
    %1008 = vmatprep.subr.mxu0 0.0
    %1009 = vmatpush1.msra.mxu0 0.0
    %1010 = vmatprep.subr.mxu0 0.0
    %1011 = vmatpush1.msra.mxu0 0.0
    %1012 = vmatprep.subr.mxu0 0.0
    %1013 = vmatpush1.msra.mxu0 0.0
    %1014 = vmatprep.subr.mxu0 0.0
    %1015 = vmatpush1.msra.mxu0 0.0
    %1016 = vmatprep.subr.mxu0 0.0
    %1017 = vmatpush1.msra.mxu0 0.0
    %1018 = vmatprep.subr.mxu0 0.0
    %1019 = vmatpush1.msra.mxu0 0.0
    %1020 = vmatprep.subr.mxu0 0.0
    %1021 = vmatpush1.msra.mxu0 0.0
    %1022 = vmatprep.subr.mxu0 0.0
    %1023 = vmatpush1.msra.mxu0 0.0
    %1024 = vmatprep.subr.mxu0 0.0
    %1025 = vmatpush1.msra.mxu0 0.0
    %1026 = vmatprep.subr.mxu0 0.0
    %1027 = vmatpush1.msra.mxu0 0.0
    %1028 = vmatprep.subr.mxu0 0.0
    %1029 = vmatpush1.msra.mxu0 0.0
    %1030 = vmatprep.subr.mxu0 0.0
    %1031 = vmatpush1.msra.mxu0 0.0
    %1032 = vmatprep.subr.mxu0 0.0
    %1033 = vmatpush1.msra.mxu0 0.0
    %1034 = vmatprep.subr.mxu0 0.0
    %1035 = vmatpush1.msra.mxu0 0.0
    %1036 = vmatprep.mubr.f32.mxu0 0.0
    %1037 = vmatmul.mubr.f32.gmra.mrb[0].mxu0 %v970
    %v1038 = vpop.f32.mrb[0].mxu0
    %v1039 = vadd.f32 0.0, %v1038
    %v1040 = vpop.f32.mrb[0].mxu0
    %1041 = vdwg.mxu0
    %1042 = vst.msk [vmem:[#allocation2 + $0x8] sm:$0xff] %vm188, %v1039
    %1043 = vrot.lane.b32.xlu0 %v178, 120
    %v1044 = vpop.permute.xlu0 %1043
    %1045 = vrot.lane.b32.xlu0 %v178, 88
    %v1046 = vpop.permute.xlu0 %1045
    %v1047 = vsel %vm188, %v1044, 0
    %v1049 = vsel %vm188, %v1046, 0
    %1051 = vmatprep.subr.mxu0 0.0
    %1052 = vmatpush1.xpose.msra.mxu0 %v1049
    %1053 = vmatprep.subr.mxu0 0.0
    %1054 = vmatpush1.xpose.msra.mxu0 0.0
    %1055 = vmatprep.subr.mxu0 0.0
    %1056 = vmatpush1.xpose.msra.mxu0 0.0
    %1057 = vmatprep.subr.mxu0 0.0
    %1058 = vmatpush1.xpose.msra.mxu0 0.0
    %1059 = vmatprep.subr.mxu0 0.0
    %1060 = vmatpush1.xpose.msra.mxu0 0.0
    %1061 = vmatprep.subr.mxu0 0.0
    %1062 = vmatpush1.xpose.msra.mxu0 0.0
    %1063 = vmatprep.subr.mxu0 0.0
    %1064 = vmatpush1.xpose.msra.mxu0 0.0
    %1065 = vmatprep.subr.mxu0 0.0
    %1066 = vmatpush1.xpose.msra.mxu0 0.0
    %1067 = vmatprep.subr.mxu0 0.0
    %1068 = vmatpush1.xpose.msra.mxu0 0.0
    %1069 = vmatprep.subr.mxu0 0.0
    %1070 = vmatpush1.xpose.msra.mxu0 0.0
    %1071 = vmatprep.subr.mxu0 0.0
    %1072 = vmatpush1.xpose.msra.mxu0 0.0
    %1073 = vmatprep.subr.mxu0 0.0
    %1074 = vmatpush1.xpose.msra.mxu0 0.0
    %1075 = vmatprep.subr.mxu0 0.0
    %1076 = vmatpush1.xpose.msra.mxu0 0.0
    %1077 = vmatprep.subr.mxu0 0.0
    %1078 = vmatpush1.xpose.msra.mxu0 0.0
    %1079 = vmatprep.subr.mxu0 0.0
    %1080 = vmatpush1.xpose.msra.mxu0 0.0
    %1081 = vmatprep.subr.mxu0 0.0
    %1082 = vmatpush1.xpose.msra.mxu0 0.0
    %1083 = vmatprep.subr.mxu0 0.0
    %1084 = vmatpush1.xpose.msra.mxu0 0.0
    %1085 = vmatprep.subr.mxu0 0.0
    %1086 = vmatpush1.xpose.msra.mxu0 0.0
    %1087 = vmatprep.subr.mxu0 0.0
    %1088 = vmatpush1.xpose.msra.mxu0 0.0
    %1089 = vmatprep.subr.mxu0 0.0
    %1090 = vmatpush1.xpose.msra.mxu0 0.0
    %1091 = vmatprep.subr.mxu0 0.0
    %1092 = vmatpush1.xpose.msra.mxu0 0.0
    %1093 = vmatprep.subr.mxu0 0.0
    %1094 = vmatpush1.xpose.msra.mxu0 0.0
    %1095 = vmatprep.subr.mxu0 0.0
    %1096 = vmatpush1.xpose.msra.mxu0 0.0
    %1097 = vmatprep.subr.mxu0 0.0
    %1098 = vmatpush1.xpose.msra.mxu0 0.0
    %1099 = vmatprep.subr.mxu0 0.0
    %1100 = vmatpush1.xpose.msra.mxu0 0.0
    %1101 = vmatprep.subr.mxu0 0.0
    %1102 = vmatpush1.xpose.msra.mxu0 0.0
    %1103 = vmatprep.subr.mxu0 0.0
    %1104 = vmatpush1.xpose.msra.mxu0 0.0
    %1105 = vmatprep.subr.mxu0 0.0
    %1106 = vmatpush1.xpose.msra.mxu0 0.0
    %1107 = vmatprep.subr.mxu0 0.0
    %1108 = vmatpush1.xpose.msra.mxu0 0.0
    %1109 = vmatprep.subr.mxu0 0.0
    %1110 = vmatpush1.xpose.msra.mxu0 0.0
    %1111 = vmatprep.subr.mxu0 0.0
    %1112 = vmatpush1.xpose.msra.mxu0 0.0
    %1113 = vmatprep.subr.mxu0 0.0
    %1114 = vmatpush1.xpose.msra.mxu0 0.0
    %1115 = vmatprep.mubr.f32.mxu0 0.0
    %1116 = vmatmul.mubr.f32.gmra.mrb[0].mxu0 %v1047
    %v1117 = vpop.f32.mrb[0].mxu0
    %v1118 = vadd.f32 0.0, %v1117
    %v1119 = vpop.f32.mrb[0].mxu0
    %1120 = vdwg.mxu0
    %v1121 = vmul.f32 %v1118, 0.35355338
    %v1122 = vadd.f32 %v1121, %v875
    %v1123 = vsel %vm188, %v1122, -inf
    %1124 = vmax.xlane.f32.xlu0 %v1123
    %v1125 = vpop.xlane.xlu0 %1124
    %v1126 = vsub.f32 %v1122, %v1125
    %v1127 = vmul.f32 %v1126, 1.442695
    %v1128 = vpow.pop %v1127
    %v1129 = vsel %vm188, %v1128, 0.0
    %1130 = vadd.xlane.f32.xlu0 %v1129
    %v1131 = vpop.xlane.xlu0 %1130
    %v1132 = vrcp.pop %v1131
    %v1133 = vmul.f32 %v1128, %v1132
    %1134 = vrot.lane.b32.xlu0 %v178, 56
    %v1135 = vpop.permute.xlu0 %1134
    %v1138 = vsel %vm188, %v1133, 0
    %1140 = vmatprep.subr.mxu0 0.0
    %1141 = vmatpush1.msra.mxu0 %v1135
    %1142 = vmatprep.subr.mxu0 0.0
    %1143 = vmatpush1.msra.mxu0 0.0
    %1144 = vmatprep.subr.mxu0 0.0
    %1145 = vmatpush1.msra.mxu0 0.0
    %1146 = vmatprep.subr.mxu0 0.0
    %1147 = vmatpush1.msra.mxu0 0.0
    %1148 = vmatprep.subr.mxu0 0.0
    %1149 = vmatpush1.msra.mxu0 0.0
    %1150 = vmatprep.subr.mxu0 0.0
    %1151 = vmatpush1.msra.mxu0 0.0
    %1152 = vmatprep.subr.mxu0 0.0
    %1153 = vmatpush1.msra.mxu0 0.0
    %1154 = vmatprep.subr.mxu0 0.0
    %1155 = vmatpush1.msra.mxu0 0.0
    %1156 = vmatprep.subr.mxu0 0.0
    %1157 = vmatpush1.msra.mxu0 0.0
    %1158 = vmatprep.subr.mxu0 0.0
    %1159 = vmatpush1.msra.mxu0 0.0
    %1160 = vmatprep.subr.mxu0 0.0
    %1161 = vmatpush1.msra.mxu0 0.0
    %1162 = vmatprep.subr.mxu0 0.0
    %1163 = vmatpush1.msra.mxu0 0.0
    %1164 = vmatprep.subr.mxu0 0.0
    %1165 = vmatpush1.msra.mxu0 0.0
    %1166 = vmatprep.subr.mxu0 0.0
    %1167 = vmatpush1.msra.mxu0 0.0
    %1168 = vmatprep.subr.mxu0 0.0
    %1169 = vmatpush1.msra.mxu0 0.0
    %1170 = vmatprep.subr.mxu0 0.0
    %1171 = vmatpush1.msra.mxu0 0.0
    %1172 = vmatprep.subr.mxu0 0.0
    %1173 = vmatpush1.msra.mxu0 0.0
    %1174 = vmatprep.subr.mxu0 0.0
    %1175 = vmatpush1.msra.mxu0 0.0
    %1176 = vmatprep.subr.mxu0 0.0
    %1177 = vmatpush1.msra.mxu0 0.0
    %1178 = vmatprep.subr.mxu0 0.0
    %1179 = vmatpush1.msra.mxu0 0.0
    %1180 = vmatprep.subr.mxu0 0.0
    %1181 = vmatpush1.msra.mxu0 0.0
    %1182 = vmatprep.subr.mxu0 0.0
    %1183 = vmatpush1.msra.mxu0 0.0
    %1184 = vmatprep.subr.mxu0 0.0
    %1185 = vmatpush1.msra.mxu0 0.0
    %1186 = vmatprep.subr.mxu0 0.0
    %1187 = vmatpush1.msra.mxu0 0.0
    %1188 = vmatprep.subr.mxu0 0.0
    %1189 = vmatpush1.msra.mxu0 0.0
    %1190 = vmatprep.subr.mxu0 0.0
    %1191 = vmatpush1.msra.mxu0 0.0
    %1192 = vmatprep.subr.mxu0 0.0
    %1193 = vmatpush1.msra.mxu0 0.0
    %1194 = vmatprep.subr.mxu0 0.0
    %1195 = vmatpush1.msra.mxu0 0.0
    %1196 = vmatprep.subr.mxu0 0.0
    %1197 = vmatpush1.msra.mxu0 0.0
    %1198 = vmatprep.subr.mxu0 0.0
    %1199 = vmatpush1.msra.mxu0 0.0
    %1200 = vmatprep.subr.mxu0 0.0
    %1201 = vmatpush1.msra.mxu0 0.0
    %1202 = vmatprep.subr.mxu0 0.0
    %1203 = vmatpush1.msra.mxu0 0.0
    %1204 = vmatprep.mubr.f32.mxu0 0.0
    %1205 = vmatmul.mubr.f32.gmra.mrb[0].mxu0 %v1138
    %v1206 = vpop.f32.mrb[0].mxu0
    %v1207 = vadd.f32 0.0, %v1206
    %v1208 = vpop.f32.mrb[0].mxu0
    %1209 = vdwg.mxu0
    %1211 = vrot.lane.b32.xlu0 %v1207, 8
    %v1212 = vpop.permute.xlu0 %1211
    %1214 = vst.msk [vmem:[#allocation2 + $0x8] sm:$0xff] %vm524, %v1212
    %1215 = vrot.lane.b32.xlu0 %v178, 112
    %v1216 = vpop.permute.xlu0 %1215
    %1217 = vrot.lane.b32.xlu0 %v178, 80
    %v1218 = vpop.permute.xlu0 %1217
    %v1219 = vsel %vm188, %v1216, 0
    %v1221 = vsel %vm188, %v1218, 0
    %1223 = vmatprep.subr.mxu0 0.0
    %1224 = vmatpush1.xpose.msra.mxu0 %v1221
    %1225 = vmatprep.subr.mxu0 0.0
    %1226 = vmatpush1.xpose.msra.mxu0 0.0
    %1227 = vmatprep.subr.mxu0 0.0
    %1228 = vmatpush1.xpose.msra.mxu0 0.0
    %1229 = vmatprep.subr.mxu0 0.0
    %1230 = vmatpush1.xpose.msra.mxu0 0.0
    %1231 = vmatprep.subr.mxu0 0.0
    %1232 = vmatpush1.xpose.msra.mxu0 0.0
    %1233 = vmatprep.subr.mxu0 0.0
    %1234 = vmatpush1.xpose.msra.mxu0 0.0
    %1235 = vmatprep.subr.mxu0 0.0
    %1236 = vmatpush1.xpose.msra.mxu0 0.0
    %1237 = vmatprep.subr.mxu0 0.0
    %1238 = vmatpush1.xpose.msra.mxu0 0.0
    %1239 = vmatprep.subr.mxu0 0.0
    %1240 = vmatpush1.xpose.msra.mxu0 0.0
    %1241 = vmatprep.subr.mxu0 0.0
    %1242 = vmatpush1.xpose.msra.mxu0 0.0
    %1243 = vmatprep.subr.mxu0 0.0
    %1244 = vmatpush1.xpose.msra.mxu0 0.0
    %1245 = vmatprep.subr.mxu0 0.0
    %1246 = vmatpush1.xpose.msra.mxu0 0.0
    %1247 = vmatprep.subr.mxu0 0.0
    %1248 = vmatpush1.xpose.msra.mxu0 0.0
    %1249 = vmatprep.subr.mxu0 0.0
    %1250 = vmatpush1.xpose.msra.mxu0 0.0
    %1251 = vmatprep.subr.mxu0 0.0
    %1252 = vmatpush1.xpose.msra.mxu0 0.0
    %1253 = vmatprep.subr.mxu0 0.0
    %1254 = vmatpush1.xpose.msra.mxu0 0.0
    %1255 = vmatprep.subr.mxu0 0.0
    %1256 = vmatpush1.xpose.msra.mxu0 0.0
    %1257 = vmatprep.subr.mxu0 0.0
    %1258 = vmatpush1.xpose.msra.mxu0 0.0
    %1259 = vmatprep.subr.mxu0 0.0
    %1260 = vmatpush1.xpose.msra.mxu0 0.0
    %1261 = vmatprep.subr.mxu0 0.0
    %1262 = vmatpush1.xpose.msra.mxu0 0.0
    %1263 = vmatprep.subr.mxu0 0.0
    %1264 = vmatpush1.xpose.msra.mxu0 0.0
    %1265 = vmatprep.subr.mxu0 0.0
    %1266 = vmatpush1.xpose.msra.mxu0 0.0
    %1267 = vmatprep.subr.mxu0 0.0
    %1268 = vmatpush1.xpose.msra.mxu0 0.0
    %1269 = vmatprep.subr.mxu0 0.0
    %1270 = vmatpush1.xpose.msra.mxu0 0.0
    %1271 = vmatprep.subr.mxu0 0.0
    %1272 = vmatpush1.xpose.msra.mxu0 0.0
    %1273 = vmatprep.subr.mxu0 0.0
    %1274 = vmatpush1.xpose.msra.mxu0 0.0
    %1275 = vmatprep.subr.mxu0 0.0
    %1276 = vmatpush1.xpose.msra.mxu0 0.0
    %1277 = vmatprep.subr.mxu0 0.0
    %1278 = vmatpush1.xpose.msra.mxu0 0.0
    %1279 = vmatprep.subr.mxu0 0.0
    %1280 = vmatpush1.xpose.msra.mxu0 0.0
    %1281 = vmatprep.subr.mxu0 0.0
    %1282 = vmatpush1.xpose.msra.mxu0 0.0
    %1283 = vmatprep.subr.mxu0 0.0
    %1284 = vmatpush1.xpose.msra.mxu0 0.0
    %1285 = vmatprep.subr.mxu0 0.0
    %1286 = vmatpush1.xpose.msra.mxu0 0.0
    %1287 = vmatprep.mubr.f32.mxu0 0.0
    %1288 = vmatmul.mubr.f32.gmra.mrb[0].mxu0 %v1219
    %v1289 = vpop.f32.mrb[0].mxu0
    %v1290 = vadd.f32 0.0, %v1289
    %v1291 = vpop.f32.mrb[0].mxu0
    %1292 = vdwg.mxu0
    %v1293 = vmul.f32 %v1290, 0.35355338
    %v1294 = vadd.f32 %v1293, %v875
    %v1295 = vsel %vm188, %v1294, -inf
    %1296 = vmax.xlane.f32.xlu0 %v1295
    %v1297 = vpop.xlane.xlu0 %1296
    %v1298 = vsub.f32 %v1294, %v1297
    %v1299 = vmul.f32 %v1298, 1.442695
    %v1300 = vpow.pop %v1299
    %v1301 = vsel %vm188, %v1300, 0.0
    %1302 = vadd.xlane.f32.xlu0 %v1301
    %v1303 = vpop.xlane.xlu0 %1302
    %v1304 = vrcp.pop %v1303
    %v1305 = vmul.f32 %v1300, %v1304
    %1306 = vrot.lane.b32.xlu0 %v178, 48
    %v1307 = vpop.permute.xlu0 %1306
    %v1310 = vsel %vm188, %v1305, 0
    %1312 = vmatprep.subr.mxu0 0.0
    %1313 = vmatpush1.msra.mxu0 %v1307
    %1314 = vmatprep.subr.mxu0 0.0
    %1315 = vmatpush1.msra.mxu0 0.0
    %1316 = vmatprep.subr.mxu0 0.0
    %1317 = vmatpush1.msra.mxu0 0.0
    %1318 = vmatprep.subr.mxu0 0.0
    %1319 = vmatpush1.msra.mxu0 0.0
    %1320 = vmatprep.subr.mxu0 0.0
    %1321 = vmatpush1.msra.mxu0 0.0
    %1322 = vmatprep.subr.mxu0 0.0
    %1323 = vmatpush1.msra.mxu0 0.0
    %1324 = vmatprep.subr.mxu0 0.0
    %1325 = vmatpush1.msra.mxu0 0.0
    %1326 = vmatprep.subr.mxu0 0.0
    %1327 = vmatpush1.msra.mxu0 0.0
    %1328 = vmatprep.subr.mxu0 0.0
    %1329 = vmatpush1.msra.mxu0 0.0
    %1330 = vmatprep.subr.mxu0 0.0
    %1331 = vmatpush1.msra.mxu0 0.0
    %1332 = vmatprep.subr.mxu0 0.0
    %1333 = vmatpush1.msra.mxu0 0.0
    %1334 = vmatprep.subr.mxu0 0.0
    %1335 = vmatpush1.msra.mxu0 0.0
    %1336 = vmatprep.subr.mxu0 0.0
    %1337 = vmatpush1.msra.mxu0 0.0
    %1338 = vmatprep.subr.mxu0 0.0
    %1339 = vmatpush1.msra.mxu0 0.0
    %1340 = vmatprep.subr.mxu0 0.0
    %1341 = vmatpush1.msra.mxu0 0.0
    %1342 = vmatprep.subr.mxu0 0.0
    %1343 = vmatpush1.msra.mxu0 0.0
    %1344 = vmatprep.subr.mxu0 0.0
    %1345 = vmatpush1.msra.mxu0 0.0
    %1346 = vmatprep.subr.mxu0 0.0
    %1347 = vmatpush1.msra.mxu0 0.0
    %1348 = vmatprep.subr.mxu0 0.0
    %1349 = vmatpush1.msra.mxu0 0.0
    %1350 = vmatprep.subr.mxu0 0.0
    %1351 = vmatpush1.msra.mxu0 0.0
    %1352 = vmatprep.subr.mxu0 0.0
    %1353 = vmatpush1.msra.mxu0 0.0
    %1354 = vmatprep.subr.mxu0 0.0
    %1355 = vmatpush1.msra.mxu0 0.0
    %1356 = vmatprep.subr.mxu0 0.0
    %1357 = vmatpush1.msra.mxu0 0.0
    %1358 = vmatprep.subr.mxu0 0.0
    %1359 = vmatpush1.msra.mxu0 0.0
    %1360 = vmatprep.subr.mxu0 0.0
    %1361 = vmatpush1.msra.mxu0 0.0
    %1362 = vmatprep.subr.mxu0 0.0
    %1363 = vmatpush1.msra.mxu0 0.0
    %1364 = vmatprep.subr.mxu0 0.0
    %1365 = vmatpush1.msra.mxu0 0.0
    %1366 = vmatprep.subr.mxu0 0.0
    %1367 = vmatpush1.msra.mxu0 0.0
    %1368 = vmatprep.subr.mxu0 0.0
    %1369 = vmatpush1.msra.mxu0 0.0
    %1370 = vmatprep.subr.mxu0 0.0
    %1371 = vmatpush1.msra.mxu0 0.0
    %1372 = vmatprep.subr.mxu0 0.0
    %1373 = vmatpush1.msra.mxu0 0.0
    %1374 = vmatprep.subr.mxu0 0.0
    %1375 = vmatpush1.msra.mxu0 0.0
    %1376 = vmatprep.mubr.f32.mxu0 0.0
    %1377 = vmatmul.mubr.f32.gmra.mrb[0].mxu0 %v1310
    %v1378 = vpop.f32.mrb[0].mxu0
    %v1379 = vadd.f32 0.0, %v1378
    %v1380 = vpop.f32.mrb[0].mxu0
    %1381 = vdwg.mxu0
    %1383 = vrot.lane.b32.xlu0 %v1379, 16
    %v1384 = vpop.permute.xlu0 %1383
    %1386 = vst.msk [vmem:[#allocation2 + $0x8] sm:$0xff] %vm697, %v1384
    %1387 = vrot.lane.b32.xlu0 %v178, 104
    %v1388 = vpop.permute.xlu0 %1387
    %1389 = vrot.lane.b32.xlu0 %v178, 72
    %v1390 = vpop.permute.xlu0 %1389
    %v1391 = vsel %vm188, %v1388, 0
    %v1393 = vsel %vm188, %v1390, 0
    %1395 = vmatprep.subr.mxu0 0.0
    %1396 = vmatpush1.xpose.msra.mxu0 %v1393
    %1397 = vmatprep.subr.mxu0 0.0
    %1398 = vmatpush1.xpose.msra.mxu0 0.0
    %1399 = vmatprep.subr.mxu0 0.0
    %1400 = vmatpush1.xpose.msra.mxu0 0.0
    %1401 = vmatprep.subr.mxu0 0.0
    %1402 = vmatpush1.xpose.msra.mxu0 0.0
    %1403 = vmatprep.subr.mxu0 0.0
    %1404 = vmatpush1.xpose.msra.mxu0 0.0
    %1405 = vmatprep.subr.mxu0 0.0
    %1406 = vmatpush1.xpose.msra.mxu0 0.0
    %1407 = vmatprep.subr.mxu0 0.0
    %1408 = vmatpush1.xpose.msra.mxu0 0.0
    %1409 = vmatprep.subr.mxu0 0.0
    %1410 = vmatpush1.xpose.msra.mxu0 0.0
    %1411 = vmatprep.subr.mxu0 0.0
    %1412 = vmatpush1.xpose.msra.mxu0 0.0
    %1413 = vmatprep.subr.mxu0 0.0
    %1414 = vmatpush1.xpose.msra.mxu0 0.0
    %1415 = vmatprep.subr.mxu0 0.0
    %1416 = vmatpush1.xpose.msra.mxu0 0.0
    %1417 = vmatprep.subr.mxu0 0.0
    %1418 = vmatpush1.xpose.msra.mxu0 0.0
    %1419 = vmatprep.subr.mxu0 0.0
    %1420 = vmatpush1.xpose.msra.mxu0 0.0
    %1421 = vmatprep.subr.mxu0 0.0
    %1422 = vmatpush1.xpose.msra.mxu0 0.0
    %1423 = vmatprep.subr.mxu0 0.0
    %1424 = vmatpush1.xpose.msra.mxu0 0.0
    %1425 = vmatprep.subr.mxu0 0.0
    %1426 = vmatpush1.xpose.msra.mxu0 0.0
    %1427 = vmatprep.subr.mxu0 0.0
    %1428 = vmatpush1.xpose.msra.mxu0 0.0
    %1429 = vmatprep.subr.mxu0 0.0
    %1430 = vmatpush1.xpose.msra.mxu0 0.0
    %1431 = vmatprep.subr.mxu0 0.0
    %1432 = vmatpush1.xpose.msra.mxu0 0.0
    %1433 = vmatprep.subr.mxu0 0.0
    %1434 = vmatpush1.xpose.msra.mxu0 0.0
    %1435 = vmatprep.subr.mxu0 0.0
    %1436 = vmatpush1.xpose.msra.mxu0 0.0
    %1437 = vmatprep.subr.mxu0 0.0
    %1438 = vmatpush1.xpose.msra.mxu0 0.0
    %1439 = vmatprep.subr.mxu0 0.0
    %1440 = vmatpush1.xpose.msra.mxu0 0.0
    %1441 = vmatprep.subr.mxu0 0.0
    %1442 = vmatpush1.xpose.msra.mxu0 0.0
    %1443 = vmatprep.subr.mxu0 0.0
    %1444 = vmatpush1.xpose.msra.mxu0 0.0
    %1445 = vmatprep.subr.mxu0 0.0
    %1446 = vmatpush1.xpose.msra.mxu0 0.0
    %1447 = vmatprep.subr.mxu0 0.0
    %1448 = vmatpush1.xpose.msra.mxu0 0.0
    %1449 = vmatprep.subr.mxu0 0.0
    %1450 = vmatpush1.xpose.msra.mxu0 0.0
    %1451 = vmatprep.subr.mxu0 0.0
    %1452 = vmatpush1.xpose.msra.mxu0 0.0
    %1453 = vmatprep.subr.mxu0 0.0
    %1454 = vmatpush1.xpose.msra.mxu0 0.0
    %1455 = vmatprep.subr.mxu0 0.0
    %1456 = vmatpush1.xpose.msra.mxu0 0.0
    %1457 = vmatprep.subr.mxu0 0.0
    %1458 = vmatpush1.xpose.msra.mxu0 0.0
    %1459 = vmatprep.mubr.f32.mxu0 0.0
    %1460 = vmatmul.mubr.f32.gmra.mrb[0].mxu0 %v1391
    %v1461 = vpop.f32.mrb[0].mxu0
    %v1462 = vadd.f32 0.0, %v1461
    %v1463 = vpop.f32.mrb[0].mxu0
    %1464 = vdwg.mxu0
    %v1465 = vmul.f32 %v1462, 0.35355338
    %v1466 = vadd.f32 %v1465, %v875
    %v1467 = vsel %vm188, %v1466, -inf
    %1468 = vmax.xlane.f32.xlu0 %v1467
    %v1469 = vpop.xlane.xlu0 %1468
    %v1470 = vsub.f32 %v1466, %v1469
    %v1471 = vmul.f32 %v1470, 1.442695
    %v1472 = vpow.pop %v1471
    %v1473 = vsel %vm188, %v1472, 0.0
    %1474 = vadd.xlane.f32.xlu0 %v1473
    %v1475 = vpop.xlane.xlu0 %1474
    %v1476 = vrcp.pop %v1475
    %v1477 = vmul.f32 %v1472, %v1476
    %1478 = vrot.lane.b32.xlu0 %v178, 40
    %v1479 = vpop.permute.xlu0 %1478
    %v1482 = vsel %vm188, %v1477, 0
    %1484 = vmatprep.subr.mxu0 0.0
    %1485 = vmatpush1.msra.mxu0 %v1479
    %1486 = vmatprep.subr.mxu0 0.0
    %1487 = vmatpush1.msra.mxu0 0.0
    %1488 = vmatprep.subr.mxu0 0.0
    %1489 = vmatpush1.msra.mxu0 0.0
    %1490 = vmatprep.subr.mxu0 0.0
    %1491 = vmatpush1.msra.mxu0 0.0
    %1492 = vmatprep.subr.mxu0 0.0
    %1493 = vmatpush1.msra.mxu0 0.0
    %1494 = vmatprep.subr.mxu0 0.0
    %1495 = vmatpush1.msra.mxu0 0.0
    %1496 = vmatprep.subr.mxu0 0.0
    %1497 = vmatpush1.msra.mxu0 0.0
    %1498 = vmatprep.subr.mxu0 0.0
    %1499 = vmatpush1.msra.mxu0 0.0
    %1500 = vmatprep.subr.mxu0 0.0
    %1501 = vmatpush1.msra.mxu0 0.0
    %1502 = vmatprep.subr.mxu0 0.0
    %1503 = vmatpush1.msra.mxu0 0.0
    %1504 = vmatprep.subr.mxu0 0.0
    %1505 = vmatpush1.msra.mxu0 0.0
    %1506 = vmatprep.subr.mxu0 0.0
    %1507 = vmatpush1.msra.mxu0 0.0
    %1508 = vmatprep.subr.mxu0 0.0
    %1509 = vmatpush1.msra.mxu0 0.0
    %1510 = vmatprep.subr.mxu0 0.0
    %1511 = vmatpush1.msra.mxu0 0.0
    %1512 = vmatprep.subr.mxu0 0.0
    %1513 = vmatpush1.msra.mxu0 0.0
    %1514 = vmatprep.subr.mxu0 0.0
    %1515 = vmatpush1.msra.mxu0 0.0
    %1516 = vmatprep.subr.mxu0 0.0
    %1517 = vmatpush1.msra.mxu0 0.0
    %1518 = vmatprep.subr.mxu0 0.0
    %1519 = vmatpush1.msra.mxu0 0.0
    %1520 = vmatprep.subr.mxu0 0.0
    %1521 = vmatpush1.msra.mxu0 0.0
    %1522 = vmatprep.subr.mxu0 0.0
    %1523 = vmatpush1.msra.mxu0 0.0
    %1524 = vmatprep.subr.mxu0 0.0
    %1525 = vmatpush1.msra.mxu0 0.0
    %1526 = vmatprep.subr.mxu0 0.0
    %1527 = vmatpush1.msra.mxu0 0.0
    %1528 = vmatprep.subr.mxu0 0.0
    %1529 = vmatpush1.msra.mxu0 0.0
    %1530 = vmatprep.subr.mxu0 0.0
    %1531 = vmatpush1.msra.mxu0 0.0
    %1532 = vmatprep.subr.mxu0 0.0
    %1533 = vmatpush1.msra.mxu0 0.0
    %1534 = vmatprep.subr.mxu0 0.0
    %1535 = vmatpush1.msra.mxu0 0.0
    %1536 = vmatprep.subr.mxu0 0.0
    %1537 = vmatpush1.msra.mxu0 0.0
    %1538 = vmatprep.subr.mxu0 0.0
    %1539 = vmatpush1.msra.mxu0 0.0
    %1540 = vmatprep.subr.mxu0 0.0
    %1541 = vmatpush1.msra.mxu0 0.0
    %1542 = vmatprep.subr.mxu0 0.0
    %1543 = vmatpush1.msra.mxu0 0.0
    %1544 = vmatprep.subr.mxu0 0.0
    %1545 = vmatpush1.msra.mxu0 0.0
    %1546 = vmatprep.subr.mxu0 0.0
    %1547 = vmatpush1.msra.mxu0 0.0
    %1548 = vmatprep.mubr.f32.mxu0 0.0
    %1549 = vmatmul.mubr.f32.gmra.mrb[0].mxu0 %v1482
    %v1550 = vpop.f32.mrb[0].mxu0
    %v1551 = vadd.f32 0.0, %v1550
    %v1552 = vpop.f32.mrb[0].mxu0
    %1553 = vdwg.mxu0
    %1555 = vrot.lane.b32.xlu0 %v1551, 24
    %v1556 = vpop.permute.xlu0 %1555
    %1558 = vst.msk [vmem:[#allocation2 + $0x8] sm:$0xff] %vm870, %v1556
    %v1559 = vld [vmem:[#allocation2] sm:$0xff]
    %v1560 = vld [vmem:[#allocation2 + $0x8] sm:$0xff]
    %v1561 = vld [vmem:[%s4] sm:$0xff]
    %v1562 = vld [vmem:[%s4 + $0x8] sm:$0xff]
    %v1563 = vld [vmem:[%s4 + $0x10] sm:$0xff]
    %v1564 = vld [vmem:[%s4 + $0x18] sm:$0xff]
    %v1565 = vld [vmem:[%s5] sm:$0x1]
    %v1567 = vlaneseq
    %v1568 = vshrl.u32 %v1567, 7
    %v1569 = vsub.s32 0, %v1568
    %v1570 = vrot.slane %v1565, %v1569
    %v1573 = vsel %vm99, %v1559, 0
    %v1576 = vsel %vm99, %v1560, 0
    %1578 = vmatprep.subr.mxu0 0.0
    %1579 = vmatpush1.msra.mxu0 %v1561
    %1580 = vmatprep.subr.mxu0 0.0
    %1581 = vmatpush1.msra.mxu0 %v1562
    %1582 = vmatprep.subr.mxu0 0.0
    %1583 = vmatpush1.msra.mxu0 %v1563
    %1584 = vmatprep.subr.mxu0 0.0
    %1585 = vmatpush1.msra.mxu0 %v1564
    %1586 = vmatprep.subr.mxu0 0.0
    %1587 = vmatpush1.msra.mxu0 0.0
    %1588 = vmatprep.subr.mxu0 0.0
    %1589 = vmatpush1.msra.mxu0 0.0
    %1590 = vmatprep.subr.mxu0 0.0
    %1591 = vmatpush1.msra.mxu0 0.0
    %1592 = vmatprep.subr.mxu0 0.0
    %1593 = vmatpush1.msra.mxu0 0.0
    %1594 = vmatprep.subr.mxu0 0.0
    %1595 = vmatpush1.msra.mxu0 0.0
    %1596 = vmatprep.subr.mxu0 0.0
    %1597 = vmatpush1.msra.mxu0 0.0
    %1598 = vmatprep.subr.mxu0 0.0
    %1599 = vmatpush1.msra.mxu0 0.0
    %1600 = vmatprep.subr.mxu0 0.0
    %1601 = vmatpush1.msra.mxu0 0.0
    %1602 = vmatprep.subr.mxu0 0.0
    %1603 = vmatpush1.msra.mxu0 0.0
    %1604 = vmatprep.subr.mxu0 0.0
    %1605 = vmatpush1.msra.mxu0 0.0
    %1606 = vmatprep.subr.mxu0 0.0
    %1607 = vmatpush1.msra.mxu0 0.0
    %1608 = vmatprep.subr.mxu0 0.0
    %1609 = vmatpush1.msra.mxu0 0.0
    %1610 = vmatprep.subr.mxu0 0.0
    %1611 = vmatpush1.msra.mxu0 0.0
    %1612 = vmatprep.subr.mxu0 0.0
    %1613 = vmatpush1.msra.mxu0 0.0
    %1614 = vmatprep.subr.mxu0 0.0
    %1615 = vmatpush1.msra.mxu0 0.0
    %1616 = vmatprep.subr.mxu0 0.0
    %1617 = vmatpush1.msra.mxu0 0.0
    %1618 = vmatprep.subr.mxu0 0.0
    %1619 = vmatpush1.msra.mxu0 0.0
    %1620 = vmatprep.subr.mxu0 0.0
    %1621 = vmatpush1.msra.mxu0 0.0
    %1622 = vmatprep.subr.mxu0 0.0
    %1623 = vmatpush1.msra.mxu0 0.0
    %1624 = vmatprep.subr.mxu0 0.0
    %1625 = vmatpush1.msra.mxu0 0.0
    %1626 = vmatprep.subr.mxu0 0.0
    %1627 = vmatpush1.msra.mxu0 0.0
    %1628 = vmatprep.subr.mxu0 0.0
    %1629 = vmatpush1.msra.mxu0 0.0
    %1630 = vmatprep.subr.mxu0 0.0
    %1631 = vmatpush1.msra.mxu0 0.0
    %1632 = vmatprep.subr.mxu0 0.0
    %1633 = vmatpush1.msra.mxu0 0.0
    %1634 = vmatprep.subr.mxu0 0.0
    %1635 = vmatpush1.msra.mxu0 0.0
    %1636 = vmatprep.subr.mxu0 0.0
    %1637 = vmatpush1.msra.mxu0 0.0
    %1638 = vmatprep.subr.mxu0 0.0
    %1639 = vmatpush1.msra.mxu0 0.0
    %1640 = vmatprep.subr.mxu0 0.0
    %1641 = vmatpush1.msra.mxu0 0.0
    %1642 = vmatprep.mubr.f32.mxu0 0.0
    %1643 = vmatmul.mubr.f32.gmra.mrb[0].mxu0 %v1573
    %v1644 = vpop.f32.mrb[0].mxu0
    %v1645 = vadd.f32 %v1570, %v1644
    %v1646 = vpop.f32.mrb[0].mxu0
    %1647 = vmatprep.mubr.f32.mxu0 0.0
    %1648 = vmatmul.mubr.f32.gmra.mrb[0].mxu0 %v1576
    %v1649 = vpop.f32.mrb[0].mxu0
    %v1650 = vadd.f32 %v1570, %v1649
    %v1651 = vpop.f32.mrb[0].mxu0
    %1652 = vdwg.mxu0
    %v1653 = vadd.f32 %v1645, %v85
    %v1654 = vadd.f32 %v1650, %v86
    %v1655 = vld [vmem:[%s6] sm:$0x1]
    %v1656 = vld [vmem:[#allocation6] sm:$0x1]
    %v1657 = vsel %vm99, %v1653, 0.0
    %1658 = vadd.xlane.f32.xlu0 %v1657
    %v1659 = vpop.xlane.xlu0 %1658
    %v1660 = vsel %vm99, %v1654, 0.0
    %1661 = vadd.xlane.f32.xlu0 %v1660
    %v1662 = vpop.xlane.xlu0 %1661
    %v1663 = vrcp.pop 32.0
    %v1664 = vmul.f32 %v1659, %v1663
    %v1665 = vmul.f32 %v1662, %v1663
    %v1666 = vsub.f32 %v1653, %v1664
    %v1667 = vsub.f32 %v1654, %v1665
    %v1668 = vmul.f32 %v1666, %v1666
    %v1669 = vmul.f32 %v1667, %v1667
    %v1670 = vsel %vm99, %v1668, 0.0
    %1671 = vadd.xlane.f32.xlu0 %v1670
    %v1672 = vpop.xlane.xlu0 %1671
    %v1673 = vsel %vm99, %v1669, 0.0
    %1674 = vadd.xlane.f32.xlu0 %v1673
    %v1675 = vpop.xlane.xlu0 %1674
    %v1676 = vmul.f32 %v1672, %v1663
    %v1677 = vmul.f32 %v1675, %v1663
    %v1678 = vadd.f32 %v1676, 1e-12
    %v1679 = vadd.f32 %v1677, 1e-12
    %v1680 = vrsqrt.pop %v1678
    %v1681 = vrsqrt.pop %v1679
    %v1682 = vmul.f32 %v1666, %v1680
    %v1683 = vmul.f32 %v1667, %v1681
    %v1685 = vlaneseq
    %v1686 = vshrl.u32 %v1685, 7
    %v1687 = vsub.s32 0, %v1686
    %v1688 = vrot.slane %v1655, %v1687
    %v1690 = vmul.f32 %v1688, %v1682
    %v1691 = vmul.f32 %v1688, %v1683
    %v1693 = vlaneseq
    %v1694 = vshrl.u32 %v1693, 7
    %v1695 = vsub.s32 0, %v1694
    %v1696 = vrot.slane %v1656, %v1695
    %v1698 = vadd.f32 %v1690, %v1696
    %v1699 = vadd.f32 %v1691, %v1696
    %v1700 = vld [vmem:[%s8] sm:$0xff]
    %v1701 = vld [vmem:[%s8 + $0x8] sm:$0xff]
    %v1702 = vld [vmem:[%s8 + $0x10] sm:$0xff]
    %v1703 = vld [vmem:[%s8 + $0x18] sm:$0xff]
    %v1704 = vld [vmem:[#allocation8] sm:$0x1]
    %v1706 = vlaneseq
    %v1707 = vshrl.u32 %v1706, 7
    %v1708 = vsub.s32 0, %v1707
    %v1709 = vrot.slane %v1704, %v1708
    %v1712 = vsel %vm99, %v1698, 0
    %v1715 = vsel %vm99, %v1699, 0
    %1717 = vmatprep.subr.mxu0 0.0
    %1718 = vmatpush1.msra.mxu0 %v1700
    %1719 = vmatprep.subr.mxu0 0.0
    %1720 = vmatpush1.msra.mxu0 %v1701
    %1721 = vmatprep.subr.mxu0 0.0
    %1722 = vmatpush1.msra.mxu0 %v1702
    %1723 = vmatprep.subr.mxu0 0.0
    %1724 = vmatpush1.msra.mxu0 %v1703
    %1725 = vmatprep.subr.mxu0 0.0
    %1726 = vmatpush1.msra.mxu0 0.0
    %1727 = vmatprep.subr.mxu0 0.0
    %1728 = vmatpush1.msra.mxu0 0.0
    %1729 = vmatprep.subr.mxu0 0.0
    %1730 = vmatpush1.msra.mxu0 0.0
    %1731 = vmatprep.subr.mxu0 0.0
    %1732 = vmatpush1.msra.mxu0 0.0
    %1733 = vmatprep.subr.mxu0 0.0
    %1734 = vmatpush1.msra.mxu0 0.0
    %1735 = vmatprep.subr.mxu0 0.0
    %1736 = vmatpush1.msra.mxu0 0.0
    %1737 = vmatprep.subr.mxu0 0.0
    %1738 = vmatpush1.msra.mxu0 0.0
    %1739 = vmatprep.subr.mxu0 0.0
    %1740 = vmatpush1.msra.mxu0 0.0
    %1741 = vmatprep.subr.mxu0 0.0
    %1742 = vmatpush1.msra.mxu0 0.0
    %1743 = vmatprep.subr.mxu0 0.0
    %1744 = vmatpush1.msra.mxu0 0.0
    %1745 = vmatprep.subr.mxu0 0.0
    %1746 = vmatpush1.msra.mxu0 0.0
    %1747 = vmatprep.subr.mxu0 0.0
    %1748 = vmatpush1.msra.mxu0 0.0
    %1749 = vmatprep.subr.mxu0 0.0
    %1750 = vmatpush1.msra.mxu0 0.0
    %1751 = vmatprep.subr.mxu0 0.0
    %1752 = vmatpush1.msra.mxu0 0.0
    %1753 = vmatprep.subr.mxu0 0.0
    %1754 = vmatpush1.msra.mxu0 0.0
    %1755 = vmatprep.subr.mxu0 0.0
    %1756 = vmatpush1.msra.mxu0 0.0
    %1757 = vmatprep.subr.mxu0 0.0
    %1758 = vmatpush1.msra.mxu0 0.0
    %1759 = vmatprep.subr.mxu0 0.0
    %1760 = vmatpush1.msra.mxu0 0.0
    %1761 = vmatprep.subr.mxu0 0.0
    %1762 = vmatpush1.msra.mxu0 0.0
    %1763 = vmatprep.subr.mxu0 0.0
    %1764 = vmatpush1.msra.mxu0 0.0
    %1765 = vmatprep.subr.mxu0 0.0
    %1766 = vmatpush1.msra.mxu0 0.0
    %1767 = vmatprep.subr.mxu0 0.0
    %1768 = vmatpush1.msra.mxu0 0.0
    %1769 = vmatprep.subr.mxu0 0.0
    %1770 = vmatpush1.msra.mxu0 0.0
    %1771 = vmatprep.subr.mxu0 0.0
    %1772 = vmatpush1.msra.mxu0 0.0
    %1773 = vmatprep.subr.mxu0 0.0
    %1774 = vmatpush1.msra.mxu0 0.0
    %1775 = vmatprep.subr.mxu0 0.0
    %1776 = vmatpush1.msra.mxu0 0.0
    %1777 = vmatprep.subr.mxu0 0.0
    %1778 = vmatpush1.msra.mxu0 0.0
    %1779 = vmatprep.subr.mxu0 0.0
    %1780 = vmatpush1.msra.mxu0 0.0
    %1781 = vmatprep.mubr.f32.mxu0 0.0
    %1782 = vmatmul.mubr.f32.gmra.mrb[0].mxu0 %v1712
    %v1783 = vpop.f32.mrb[0].mxu0
    %v1784 = vadd.f32 %v1709, %v1783
    %v1785 = vpop.f32.mrb[0].mxu0
    %1786 = vmatprep.mubr.f32.mxu0 0.0
    %1787 = vmatmul.mubr.f32.gmra.mrb[0].mxu0 %v1715
    %v1788 = vpop.f32.mrb[0].mxu0
    %v1789 = vadd.f32 %v1709, %v1788
    %v1790 = vpop.f32.mrb[0].mxu0
    %1791 = vdwg.mxu0
    %v1792 = vmul.f32 %v1784, 0.5
    %v1793 = vmul.f32 %v1789, 0.5
    %v1794 = vrcp.pop 1.4142135
    %v1795 = vmul.f32 %v1784, %v1794
    %v1796 = vmul.f32 %v1789, %v1794
    %v1797 = vand.u32 2147483647, %v1795
    %v1798 = vand.u32 2147483647, %v1796
    %v1799 = vmul.f32 %v1797, 0.3275911
    %v1800 = vmul.f32 %v1798, 0.3275911
    %v1801 = vadd.f32 %v1799, 1.0
    %v1802 = vadd.f32 %v1800, 1.0
    %v1803 = vrcp.pop %v1801
    %v1804 = vmul.f32 1.0, %v1803
    %v1805 = vrcp.pop %v1802
    %v1806 = vmul.f32 1.0, %v1805
    %v1807 = vmul.f32 %v1804, 1.0614054
    %v1808 = vmul.f32 %v1806, 1.0614054
    %v1809 = vadd.f32 %v1807, -1.4531521
    %v1810 = vadd.f32 %v1808, -1.4531521
    %v1811 = vmul.f32 %v1809, %v1804
    %v1812 = vmul.f32 %v1810, %v1806
    %v1813 = vadd.f32 %v1811, 1.4214138
    %v1814 = vadd.f32 %v1812, 1.4214138
    %v1815 = vmul.f32 %v1813, %v1804
    %v1816 = vmul.f32 %v1814, %v1806
    %v1817 = vadd.f32 %v1815, -0.28449672
    %v1818 = vadd.f32 %v1816, -0.28449672
    %v1819 = vmul.f32 %v1817, %v1804
    %v1820 = vmul.f32 %v1818, %v1806
    %v1821 = vadd.f32 %v1819, 0.2548296
    %v1822 = vadd.f32 %v1820, 0.2548296
    %v1823 = vmul.f32 %v1821, %v1804
    %v1824 = vmul.f32 %v1822, %v1806
    %v1825 = vsub.f32 0.0, %v1797
    %v1826 = vsub.f32 0.0, %v1798
    %v1827 = vmul.f32 %v1825, %v1797
    %v1828 = vmul.f32 %v1826, %v1798
    %v1829 = vmul.f32 %v1827, 1.442695
    %v1830 = vpow.pop %v1829
    %v1831 = vmul.f32 %v1828, 1.442695
    %v1832 = vpow.pop %v1831
    %v1833 = vmul.f32 %v1823, %v1830
    %v1834 = vmul.f32 %v1824, %v1832
    %v1835 = vsub.f32 1.0, %v1833
    %v1836 = vsub.f32 1.0, %v1834
    %vm1837 = vcmp.ge.f32.partialorder %v1795, 0.0
    %vm1838 = vcmp.ge.f32.partialorder %v1796, 0.0
    %v1839 = vsub.f32 0.0, %v1835
    %v1840 = vsub.f32 0.0, %v1836
    %v1841 = vsel %vm1837, %v1835, %v1839
    %v1842 = vsel %vm1838, %v1836, %v1840
    %v1843 = vadd.f32 %v1841, 1.0
    %v1844 = vadd.f32 %v1842, 1.0
    %v1845 = vmul.f32 %v1792, %v1843
    %v1846 = vmul.f32 %v1793, %v1844
    %v1847 = vld [vmem:[%s10] sm:$0xff]
    %v1848 = vld [vmem:[%s10 + $0x8] sm:$0xff]
    %v1849 = vld [vmem:[%s10 + $0x10] sm:$0xff]
    %v1850 = vld [vmem:[%s10 + $0x18] sm:$0xff]
    %v1851 = vld [vmem:[%s10 + $0x20] sm:$0xff]
    %v1852 = vld [vmem:[%s10 + $0x28] sm:$0xff]
    %v1853 = vld [vmem:[%s10 + $0x30] sm:$0xff]
    %v1854 = vld [vmem:[%s10 + $0x38] sm:$0xff]
    %v1855 = vld [vmem:[%s11] sm:$0x1]
    %v1857 = vlaneseq
    %v1858 = vshrl.u32 %v1857, 7
    %v1859 = vsub.s32 0, %v1858
    %v1860 = vrot.slane %v1855, %v1859
    %vm1862 = vcmask 523264
    %v1864 = vsel %vm1862, %v1845, 0
    %v1867 = vsel %vm1862, %v1846, 0
    %1869 = vmatprep.subr.mxu0 0.0
    %1870 = vmatpush1.msra.mxu0 %v1847
    %1871 = vmatprep.subr.mxu0 0.0
    %1872 = vmatpush1.msra.mxu0 %v1848
    %1873 = vmatprep.subr.mxu0 0.0
    %1874 = vmatpush1.msra.mxu0 %v1849
    %1875 = vmatprep.subr.mxu0 0.0
    %1876 = vmatpush1.msra.mxu0 %v1850
    %1877 = vmatprep.subr.mxu0 0.0
    %1878 = vmatpush1.msra.mxu0 %v1851
    %1879 = vmatprep.subr.mxu0 0.0
    %1880 = vmatpush1.msra.mxu0 %v1852
    %1881 = vmatprep.subr.mxu0 0.0
    %1882 = vmatpush1.msra.mxu0 %v1853
    %1883 = vmatprep.subr.mxu0 0.0
    %1884 = vmatpush1.msra.mxu0 %v1854
    %1885 = vmatprep.subr.mxu0 0.0
    %1886 = vmatpush1.msra.mxu0 0.0
    %1887 = vmatprep.subr.mxu0 0.0
    %1888 = vmatpush1.msra.mxu0 0.0
    %1889 = vmatprep.subr.mxu0 0.0
    %1890 = vmatpush1.msra.mxu0 0.0
    %1891 = vmatprep.subr.mxu0 0.0
    %1892 = vmatpush1.msra.mxu0 0.0
    %1893 = vmatprep.subr.mxu0 0.0
    %1894 = vmatpush1.msra.mxu0 0.0
    %1895 = vmatprep.subr.mxu0 0.0
    %1896 = vmatpush1.msra.mxu0 0.0
    %1897 = vmatprep.subr.mxu0 0.0
    %1898 = vmatpush1.msra.mxu0 0.0
    %1899 = vmatprep.subr.mxu0 0.0
    %1900 = vmatpush1.msra.mxu0 0.0
    %1901 = vmatprep.subr.mxu0 0.0
    %1902 = vmatpush1.msra.mxu0 0.0
    %1903 = vmatprep.subr.mxu0 0.0
    %1904 = vmatpush1.msra.mxu0 0.0
    %1905 = vmatprep.subr.mxu0 0.0
    %1906 = vmatpush1.msra.mxu0 0.0
    %1907 = vmatprep.subr.mxu0 0.0
    %1908 = vmatpush1.msra.mxu0 0.0
    %1909 = vmatprep.subr.mxu0 0.0
    %1910 = vmatpush1.msra.mxu0 0.0
    %1911 = vmatprep.subr.mxu0 0.0
    %1912 = vmatpush1.msra.mxu0 0.0
    %1913 = vmatprep.subr.mxu0 0.0
    %1914 = vmatpush1.msra.mxu0 0.0
    %1915 = vmatprep.subr.mxu0 0.0
    %1916 = vmatpush1.msra.mxu0 0.0
    %1917 = vmatprep.subr.mxu0 0.0
    %1918 = vmatpush1.msra.mxu0 0.0
    %1919 = vmatprep.subr.mxu0 0.0
    %1920 = vmatpush1.msra.mxu0 0.0
    %1921 = vmatprep.subr.mxu0 0.0
    %1922 = vmatpush1.msra.mxu0 0.0
    %1923 = vmatprep.subr.mxu0 0.0
    %1924 = vmatpush1.msra.mxu0 0.0
    %1925 = vmatprep.subr.mxu0 0.0
    %1926 = vmatpush1.msra.mxu0 0.0
    %1927 = vmatprep.subr.mxu0 0.0
    %1928 = vmatpush1.msra.mxu0 0.0
    %1929 = vmatprep.subr.mxu0 0.0
    %1930 = vmatpush1.msra.mxu0 0.0
    %1931 = vmatprep.subr.mxu0 0.0
    %1932 = vmatpush1.msra.mxu0 0.0
    %1933 = vmatprep.mubr.f32.mxu0 0.0
    %1934 = vmatmul.mubr.f32.gmra.mrb[0].mxu0 %v1864
    %v1935 = vpop.f32.mrb[0].mxu0
    %v1936 = vadd.f32 %v1860, %v1935
    %v1937 = vpop.f32.mrb[0].mxu0
    %1938 = vmatprep.mubr.f32.mxu0 0.0
    %1939 = vmatmul.mubr.f32.gmra.mrb[0].mxu0 %v1867
    %v1940 = vpop.f32.mrb[0].mxu0
    %v1941 = vadd.f32 %v1860, %v1940
    %v1942 = vpop.f32.mrb[0].mxu0
    %1943 = vdwg.mxu0
    %v1944 = vadd.f32 %v1936, %v1698
    %v1945 = vadd.f32 %v1941, %v1699
    %v1946 = vld [vmem:[%s12] sm:$0x1]
    %v1947 = vld [vmem:[%s13] sm:$0x1]
    %v1948 = vsel %vm99, %v1944, 0.0
    %1949 = vadd.xlane.f32.xlu0 %v1948
    %v1950 = vpop.xlane.xlu0 %1949
    %v1951 = vsel %vm99, %v1945, 0.0
    %1952 = vadd.xlane.f32.xlu0 %v1951
    %v1953 = vpop.xlane.xlu0 %1952
    %v1954 = vmul.f32 %v1950, %v1663
    %v1955 = vmul.f32 %v1953, %v1663
    %v1956 = vsub.f32 %v1944, %v1954
    %v1957 = vsub.f32 %v1945, %v1955
    %v1958 = vmul.f32 %v1956, %v1956
    %v1959 = vmul.f32 %v1957, %v1957
    %v1960 = vsel %vm99, %v1958, 0.0
    %1961 = vadd.xlane.f32.xlu0 %v1960
    %v1962 = vpop.xlane.xlu0 %1961
    %v1963 = vsel %vm99, %v1959, 0.0
    %1964 = vadd.xlane.f32.xlu0 %v1963
    %v1965 = vpop.xlane.xlu0 %1964
    %v1966 = vmul.f32 %v1962, %v1663
    %v1967 = vmul.f32 %v1965, %v1663
    %v1968 = vadd.f32 %v1966, 1e-12
    %v1969 = vadd.f32 %v1967, 1e-12
    %v1970 = vrsqrt.pop %v1968
    %v1971 = vrsqrt.pop %v1969
    %v1972 = vmul.f32 %v1956, %v1970
    %v1973 = vmul.f32 %v1957, %v1971
    %v1975 = vlaneseq
    %v1976 = vshrl.u32 %v1975, 7
    %v1977 = vsub.s32 0, %v1976
    %v1978 = vrot.slane %v1946, %v1977
    %v1980 = vmul.f32 %v1978, %v1972
    %v1981 = vmul.f32 %v1978, %v1973
    %v1983 = vlaneseq
    %v1984 = vshrl.u32 %v1983, 7
    %v1985 = vsub.s32 0, %v1984
    %v1986 = vrot.slane %v1947, %v1985
    %v1988 = vadd.f32 %v1980, %v1986
    %v1989 = vadd.f32 %v1981, %v1986
    %1990 = vst.msk [vmem:[#allocation9] sm:$0xff] %vm99, %v1988
    %1991 = vst.msk [vmem:[#allocation9 + $0x8] sm:$0xff] %vm99, %v1989
    // Predicated region
    $region70: #{tpu_custom_call.1} parent=1 // pred_check
      _
    $region71: #{tpu_custom_call.1} parent=1 // pred_check_branch
      %1993 = sbr.rel (0) target = $region73
    $region72: #{tpu_custom_call.1} parent=1 // pred_region
      %s1995 = ssub.s32 256, 256
      %1996 = vsyncadd [#allocation5], %s1995
      %s1997 = sshll.u32 [#allocation9], 4
      %s1998 = int_to_ptr.vmem [resolvable:$true] %s1997
      %2003 = dma.vmem_to_hbm [thread:$0]  %s1998, 256, %s14, [#allocation5], 128, 128, 8
    $region73: #{tpu_custom_call.1} parent=1 // pred_fallthru
      _
    // Predicated region
    $region74: #{tpu_custom_call.1} parent=1 // pred_check
      _
    $region75: #{tpu_custom_call.1} parent=1 // pred_check_branch
      %2005 = sbr.rel (0) target = $region77
    $region76: #{tpu_custom_call.1} parent=1 // pred_region
      %2006 = dma.done [#allocation5], 256
    $region77: #{tpu_custom_call.1} parent=1 // pred_fallthru
      _
    %2007 = vsyncpa [#allocation4], 1
    %2008 = vsyncpa [#allocation7], 1
    %2009 = vsyncpa [#allocation5], 1

</llo_original>
